<compile_context>
chip_gen: v5e
topology: v5e:2x2
jax: 0.10.0
libtpu: 0.0.40
codegen_flags: <defaults>
</compile_context>

<pallas_src>
import functools

import jax
import jax.numpy as jnp
from jax.experimental import pallas as pl
from jax.experimental.pallas import tpu as pltpu

GN_GROUPS = 2          # GroupNorm(2, C)
GN_EPS = 1e-5          # PyTorch default eps
LANE = 128             # pad contraction dims to this (128 ok for v5e; one MXU pass anyway)
# Set to jnp.bfloat16 on v6e/v7x once C_hid/H/W grow (keeps f32 accumulation via
# preferred_element_type). f32 here: toy sizes, tight correctness check, v5e-safe.
MATMUL_DTYPE = jnp.float32
VMEM_LIMIT_BYTES = 32 * 1024 * 1024


def sampling_generator(N, reverse=False):
    samplings = [False, True] * (N // 2)
    return list(reversed(samplings[:N])) if reverse else samplings[:N]


def _round_up(x, m):
    return (x + m - 1) // m * m


# ---------------------------------------------------------------------------
# In-kernel fused GroupNorm (conv bias folded) + affine + SiLU.
# Transposed (C, M) layout; per-sample statistics via indicator matmuls.
# ---------------------------------------------------------------------------
def _gn_silu_t(y, b_col, gamma_col, beta_col, ind, indt, *, groups, eps, hw):
    """y: (C, M) f32 bias-free conv output, M = N*hw, columns sample-major.
    b/gamma/beta: (C, 1). ind: (M, Np) one-hot sample indicator (Np >= N,
    extra columns zero), indt = ind.T. Returns SiLU(GN(y + b)) as (C, M)."""
    C, _ = y.shape
    n_cols = ind.shape[1]
    Cg = C // groups
    cnt = float(hw * Cg)

    # Per-(channel, sample) sums of the *biased* conv output; bias folded
    # analytically (each channel contributes hw copies of its bias).
    s_cn = jnp.dot(y, ind, preferred_element_type=jnp.float32) + hw * b_col    # (C, Np)

    # Per-(group, sample) mean via contiguous sublane slices (no iota/where),
    # expanded to a per-(channel, sample) centering vector.
    rows = []
    for g in range(groups):
        mu = jnp.sum(s_cn[g * Cg:(g + 1) * Cg, :], axis=0, keepdims=True) / cnt
        rows.append(jnp.broadcast_to(mu, (Cg, n_cols)))
    mean_cn = jnp.concatenate(rows, axis=0)                                    # (C, Np)
    center_cn = b_col - mean_cn                                                # (C, Np)

    # Centered activation (includes the conv bias): yc = (y + b) - mean.
    yc = y + jnp.dot(center_cn, indt, preferred_element_type=jnp.float32)      # (C, M)

    # Centered second pass for the variance (no E[y^2]-E[y]^2 cancellation).
    sq_cn = jnp.dot(yc * yc, ind, preferred_element_type=jnp.float32)          # (C, Np)
    rows = []
    for g in range(groups):
        var = jnp.sum(sq_cn[g * Cg:(g + 1) * Cg, :], axis=0, keepdims=True) / cnt
        rows.append(jnp.broadcast_to(jax.lax.rsqrt(var + eps), (Cg, n_cols)))
    inv_cn = jnp.concatenate(rows, axis=0)                                     # (C, Np)
    scale_map = jnp.dot(gamma_col * inv_cn, indt,
                        preferred_element_type=jnp.float32)                    # (C, M)

    ya = yc * scale_map + beta_col
    return ya * jax.nn.sigmoid(ya)                                             # SiLU


def _layer_kernel(pt_ref, wt_ref, b_ref, g_ref, bt_ref, ind_ref, indt_ref,
                  o_ref, *, groups, eps, hw):
    # Single lane-aligned MXU matmul: (Cout, Kc_pad) x (Kc_pad, M).
    y = jnp.dot(wt_ref[...], pt_ref[...], preferred_element_type=jnp.float32)
    act = _gn_silu_t(y, b_ref[...], g_ref[...], bt_ref[...],
                     ind_ref[...], indt_ref[...], groups=groups, eps=eps, hw=hw)
    o_ref[...] = act.astype(o_ref.dtype)                    # (Cout, M), lane-dense


def _last_layer_kernel(pt_ref, wt_ref, b_ref, g_ref, bt_ref, ind_ref, indt_ref,
                       rwt_ref, rb_ref, o_ref, *, groups, eps, hw):
    y = jnp.dot(wt_ref[...], pt_ref[...], preferred_element_type=jnp.float32)
    act = _gn_silu_t(y, b_ref[...], g_ref[...], bt_ref[...],
                     ind_ref[...], indt_ref[...], groups=groups, eps=eps, hw=hw)
    # Folded 1x1 readout on the VMEM-resident activation: (C_out, C_hid) x (C_hid, M).
    out = jnp.dot(rwt_ref[...], act, preferred_element_type=jnp.float32) + rb_ref[...]
    o_ref[...] = out.astype(o_ref.dtype)                    # (C_out, M), lane-dense


# ---------------------------------------------------------------------------
# Wrapper-side operand preparation (lane-aligned im2col, transposed weights,
# per-channel column vectors, per-sample indicator matrices).
# ---------------------------------------------------------------------------
def _im2col_t(x, K):
    """Transposed, lane-padded patch matrix (Kc_pad, N*H*W); feature order
    (kh, kw, cin) matches HWIO weight flattening."""
    N, H, W, Cin = x.shape
    p = K // 2
    xp = jnp.pad(x, ((0, 0), (p, p), (p, p), (0, 0)))
    taps = [xp[:, kh:kh + H, kw:kw + W, :] for kh in range(K) for kw in range(K)]
    patches = jnp.concatenate(taps, axis=-1).reshape(N * H * W, K * K * Cin)
    kc = K * K * Cin
    kc_pad = _round_up(kc, LANE)
    if kc_pad != kc:
        patches = jnp.pad(patches, ((0, 0), (0, kc_pad - kc)))
    return patches.T.astype(MATMUL_DTYPE), kc_pad           # (kc_pad, M)


def _weight_t(w_hwio, kc_pad):
    K, _, Cin, Cout = w_hwio.shape
    kc = K * K * Cin
    w = w_hwio.reshape(kc, Cout)
    if kc_pad != kc:
        w = jnp.pad(w, ((0, kc_pad - kc), (0, 0)))
    return w.T.astype(MATMUL_DTYPE)                          # (Cout, kc_pad)


def _layer_operands(x, lp, upsampling):
    N, H, W, _ = x.shape
    K = lp['conv_w'].shape[0]
    Cout = lp['conv_w'].shape[-1]
    hw = H * W
    pt, kc_pad = _im2col_t(x, K)
    wt = _weight_t(lp['conv_w'], kc_pad)
    b_col = lp['conv_b'].reshape(Cout, 1).astype(jnp.float32)
    if upsampling:
        # GN + affine applied pre-PixelShuffle: group stats of the shuffled
        # tensor equal those of contiguous pre-shuffle channel blocks; the
        # per-channel gamma/beta are repeated 4x (pre-shuffle ch = c*4 + k).
        gamma = jnp.repeat(lp['gn_w'], 4).reshape(Cout, 1).astype(jnp.float32)
        beta = jnp.repeat(lp['gn_b'], 4).reshape(Cout, 1).astype(jnp.float32)
    else:
        gamma = lp['gn_w'].reshape(Cout, 1).astype(jnp.float32)
        beta = lp['gn_b'].reshape(Cout, 1).astype(jnp.float32)
    # One-hot sample indicator (padded to >=8 columns; extra columns are zero
    # and never influence real outputs).
    n_pad = _round_up(N, 8)
    eye = jnp.eye(N, n_pad, dtype=jnp.float32)
    ind = jnp.repeat(eye, hw, axis=0)                        # (N*hw, n_pad)
    return pt, wt, b_col, gamma, beta, ind, ind.T, (N, H, W, Cout, hw)


def pixel_shuffle_nhwc(y, r=2):
    N, H, W, C4 = y.shape
    C = C4 // (r * r)
    y = y.reshape(N, H, W, C, r, r)
    y = jnp.transpose(y, (0, 1, 4, 2, 5, 3))
    return y.reshape(N, H * r, W * r, C)


def _compiler_params():
    return pltpu.CompilerParams(dimension_semantics=("arbitrary",),
                                vmem_limit_bytes=VMEM_LIMIT_BYTES)


def fused_layer(x, lp, upsampling):
    """conv + bias-fold + GroupNorm + SiLU as one single-block pallas_call
    (batch folded into the matmul M dim). PixelShuffle is wrapper plumbing."""
    pt, wt, b, g, bt, ind, indt, dims = _layer_operands(x, lp, upsampling)
    N, H, W, Cout, hw = dims
    M = N * hw
    out_t = pl.pallas_call(
        functools.partial(_layer_kernel, groups=GN_GROUPS, eps=GN_EPS, hw=hw),
        out_shape=jax.ShapeDtypeStruct((Cout, M), x.dtype),
        grid=(1,),
        in_specs=[pl.BlockSpec(a.shape, lambda i: (0, 0))
                  for a in (pt, wt, b, g, bt, ind, indt)],
        out_specs=pl.BlockSpec((Cout, M), lambda i: (0, 0)),
        compiler_params=_compiler_params(),
    )(pt, wt, b, g, bt, ind, indt)
    y = out_t.T.reshape(N, H, W, Cout)                       # back to NHWC (pre-shuffle)
    if upsampling:
        y = pixel_shuffle_nhwc(y, 2)
    return y


def fused_last_layer(x, lp, ro_w_hwio, ro_b):
    """Last decoder layer with the 1x1 readout folded in; emits the transposed
    (C_out, N*H*W) result so stores are lane-dense and NCHW output is cheap."""
    pt, wt, b, g, bt, ind, indt, dims = _layer_operands(x, lp, False)
    N, H, W, Cout, hw = dims
    M = N * hw
    C_out = ro_w_hwio.shape[-1]
    rwt = ro_w_hwio.reshape(Cout, C_out).T.astype(jnp.float32)   # (C_out, C_hid)
    rb = ro_b.reshape(C_out, 1).astype(jnp.float32)
    out_t = pl.pallas_call(
        functools.partial(_last_layer_kernel, groups=GN_GROUPS, eps=GN_EPS, hw=hw),
        out_shape=jax.ShapeDtypeStruct((C_out, M), x.dtype),
        grid=(1,),
        in_specs=[pl.BlockSpec(a.shape, lambda i: (0, 0))
                  for a in (pt, wt, b, g, bt, ind, indt, rwt, rb)],
        out_specs=pl.BlockSpec((C_out, M), lambda i: (0, 0)),
        compiler_params=_compiler_params(),
    )(pt, wt, b, g, bt, ind, indt, rwt, rb)
    return out_t                                             # (C_out, N*H*W)


# ---------------------------------------------------------------------------
# Decoder forward (Pallas path)
# ---------------------------------------------------------------------------
def decoder_forward(hid_nchw, enc1_nchw, params, N_S):
    samplings = sampling_generator(N_S, reverse=True)
    hid = jnp.transpose(hid_nchw, (0, 2, 3, 1))              # NCHW -> NHWC
    enc1 = jnp.transpose(enc1_nchw, (0, 2, 3, 1))

    for i in range(N_S - 1):
        hid = fused_layer(hid, params['dec'][i], samplings[i])

    # The reversed sampling list always ends with False -> last layer never
    # upsamples, so the readout can be fused into its kernel.
    assert not samplings[N_S - 1]
    x_last = hid + enc1
    N, Hf, Wf, _ = x_last.shape
    C_out = params['ro_w'].shape[-1]
    Yt = fused_last_layer(x_last, params['dec'][N_S - 1],
                          params['ro_w'], params['ro_b'])    # (C_out, N*Hf*Wf)
    # Lane-dense transposed output -> NCHW via reshape + leading transpose.
    return Yt.reshape(C_out, N, Hf, Wf).transpose(1, 0, 2, 3)


# ---------------------------------------------------------------------------
# Pure-JAX reference (for correctness check of the Pallas kernels)
# ---------------------------------------------------------------------------
def conv2d_ref(x, w_hwio, b):
    K = w_hwio.shape[0]
    p = K // 2
    out = jax.lax.conv_general_dilated(
        x, w_hwio, (1, 1), ((p, p), (p, p)),
        dimension_numbers=('NHWC', 'HWIO', 'NHWC'),
        precision=jax.lax.Precision.HIGHEST)
    return out + b


def gn_silu_ref(y, gamma, beta):
    N, H, W, C = y.shape
    G = GN_GROUPS
    yg = y.reshape(N, H, W, G, C // G)
    mean = yg.mean(axis=(1, 2, 4), keepdims=True)
    var = jnp.square(yg - mean).mean(axis=(1, 2, 4), keepdims=True)
    yn = ((yg - mean) * jax.lax.rsqrt(var + GN_EPS)).reshape(N, H, W, C)
    ya = yn * gamma + beta
    return ya * jax.nn.sigmoid(ya)


def decoder_forward_ref(hid_nchw, enc1_nchw, params, N_S):
    samplings = sampling_generator(N_S, reverse=True)
    hid = jnp.transpose(hid_nchw, (0, 2, 3, 1))
    enc1 = jnp.transpose(enc1_nchw, (0, 2, 3, 1))

    def layer(x, lp, up):
        y = conv2d_ref(x, lp['conv_w'], lp['conv_b'])
        if up:
            y = pixel_shuffle_nhwc(y, 2)
        return gn_silu_ref(y, lp['gn_w'], lp['gn_b'])

    for i in range(N_S - 1):
        hid = layer(hid, params['dec'][i], samplings[i])
    Y = layer(hid + enc1, params['dec'][N_S - 1], samplings[N_S - 1])
    Y = conv2d_ref(Y, params['ro_w'], params['ro_b'])
    return jnp.transpose(Y, (0, 3, 1, 2))


# ---------------------------------------------------------------------------
# Deterministic parameter init (shapes follow the PyTorch __init__)
# ---------------------------------------------------------------------------
def init_params(key, C_hid, C_out, N_S, K):
    samplings = sampling_generator(N_S, reverse=True)
    keys = jax.random.split(key, 2 * N_S + 1)
    dec = []
    for i, up in enumerate(samplings):
        cout = C_hid * 4 if up else C_hid                    # PixelShuffle needs 4x
        kw_, kb_ = jax.random.split(keys[i])
        w_oihw = jax.random.normal(kw_, (cout, C_hid, K, K), jnp.float32) * 0.2
        b_ = jax.random.normal(kb_, (cout,), jnp.float32) * 0.05
        kg, kbeta = jax.random.split(keys[N_S + i])
        gn_w = 1.0 + 0.1 * jax.random.normal(kg, (C_hid,), jnp.float32)
        gn_b = 0.1 * jax.random.normal(kbeta, (C_hid,), jnp.float32)
        dec.append(dict(conv_w=jnp.transpose(w_oihw, (2, 3, 1, 0)),  # OIHW->HWIO
                        conv_b=b_, gn_w=gn_w, gn_b=gn_b))
    kro_w, kro_b = jax.random.split(keys[-1])
    ro_oihw = jax.random.normal(kro_w, (C_out, C_hid, 1, 1), jnp.float32) * 0.2
    ro_b = jax.random.normal(kro_b, (C_out,), jnp.float32) * 0.05
    return dict(dec=dec, ro_w=jnp.transpose(ro_oihw, (2, 3, 1, 0)), ro_b=ro_b)


if __name__ == "__main__":
    C_hid, C_out, N_S, spatio_kernel = 8, 4, 2, 3
    B, H, W = 2, 8, 8                    # samplings (reversed) = [True, False]

    key = jax.random.PRNGKey(0)
    k1, k2, k3 = jax.random.split(key, 3)
    hid = jax.random.normal(k1, (B, C_hid, H, W), jnp.float32)          # NCHW
    enc1 = jax.random.normal(k2, (B, C_hid, 2 * H, 2 * W), jnp.float32)
    params = init_params(k3, C_hid, C_out, N_S, spatio_kernel)

    fwd = jax.jit(functools.partial(decoder_forward, N_S=N_S))
    out = jax.block_until_ready(fwd(hid, enc1, params))

    ref = decoder_forward_ref(hid, enc1, params, N_S)
    assert out.shape == (B, C_out, 2 * H, 2 * W), out.shape
    max_err = float(jnp.max(jnp.abs(out - ref)))
    assert jnp.allclose(out, ref, rtol=1e-3, atol=1e-3), max_err
    print("KERNEL_OK")
</pallas_src>

<mosaic_0001>
module attributes {stable_mosaic.version = 11 : i64} {
  func.func @_layer_kernel(%arg0: i32, %arg1: memref<128x128xf32, #tpu.memory_space<vmem>>, %arg2: memref<32x128xf32, #tpu.memory_space<vmem>>, %arg3: memref<32x1xf32, #tpu.memory_space<vmem>>, %arg4: memref<32x1xf32, #tpu.memory_space<vmem>>, %arg5: memref<32x1xf32, #tpu.memory_space<vmem>>, %arg6: memref<128x8xf32, #tpu.memory_space<vmem>>, %arg7: memref<8x128xf32, #tpu.memory_space<vmem>>, %arg8: memref<32x128xf32, #tpu.memory_space<vmem>>) attributes {dimension_semantics = [#tpu.dimension_semantics<arbitrary>], iteration_bounds = array<i64: 1>, scalar_prefetch = 0 : i64, scratch_operands = 0 : i64, tpu.core_type = #tpu.core_type<tc>, window_params = [{pipeline_mode = #tpu.pipeline_mode<synchronous>, transform_indices = @transform_0, window_bounds = array<i64: 128, 128>}, {pipeline_mode = #tpu.pipeline_mode<synchronous>, transform_indices = @transform_1, window_bounds = array<i64: 32, 128>}, {pipeline_mode = #tpu.pipeline_mode<synchronous>, transform_indices = @transform_2, window_bounds = array<i64: 32, 1>}, {pipeline_mode = #tpu.pipeline_mode<synchronous>, transform_indices = @transform_3, window_bounds = array<i64: 32, 1>}, {pipeline_mode = #tpu.pipeline_mode<synchronous>, transform_indices = @transform_4, window_bounds = array<i64: 32, 1>}, {pipeline_mode = #tpu.pipeline_mode<synchronous>, transform_indices = @transform_5, window_bounds = array<i64: 128, 8>}, {pipeline_mode = #tpu.pipeline_mode<synchronous>, transform_indices = @transform_6, window_bounds = array<i64: 8, 128>}, {pipeline_mode = #tpu.pipeline_mode<synchronous>, transform_indices = @transform_7, window_bounds = array<i64: 32, 128>}]} {
    %c0 = arith.constant 0 : index
    %c0_0 = arith.constant 0 : index
    %0 = vector.load %arg2[%c0, %c0_0] : memref<32x128xf32, #tpu.memory_space<vmem>>, vector<32x128xf32>
    %c0_1 = arith.constant 0 : index
    %c0_2 = arith.constant 0 : index
    %1 = vector.load %arg1[%c0_1, %c0_2] : memref<128x128xf32, #tpu.memory_space<vmem>>, vector<128x128xf32>
    %cst = arith.constant dense<0.000000e+00> : vector<32x128xf32>
    %2 = tpu.matmul %0, %1, %cst {dimension_numbers = #tpu.dot_dimension_numbers<[1], [0], [0], [1], [0, 0, 1, 1], [], []>} : vector<32x128xf32>, vector<128x128xf32>, vector<32x128xf32> -> vector<32x128xf32>
    %c0_3 = arith.constant 0 : index
    %c0_4 = arith.constant 0 : index
    %3 = vector.load %arg3[%c0_3, %c0_4] : memref<32x1xf32, #tpu.memory_space<vmem>>, vector<32x1xf32>
    %c0_5 = arith.constant 0 : index
    %c0_6 = arith.constant 0 : index
    %4 = vector.load %arg4[%c0_5, %c0_6] : memref<32x1xf32, #tpu.memory_space<vmem>>, vector<32x1xf32>
    %c0_7 = arith.constant 0 : index
    %c0_8 = arith.constant 0 : index
    %5 = vector.load %arg5[%c0_7, %c0_8] : memref<32x1xf32, #tpu.memory_space<vmem>>, vector<32x1xf32>
    %c0_9 = arith.constant 0 : index
    %c0_10 = arith.constant 0 : index
    %6 = vector.load %arg6[%c0_9, %c0_10] : memref<128x8xf32, #tpu.memory_space<vmem>>, vector<128x8xf32>
    %c0_11 = arith.constant 0 : index
    %c0_12 = arith.constant 0 : index
    %7 = vector.load %arg7[%c0_11, %c0_12] : memref<8x128xf32, #tpu.memory_space<vmem>>, vector<8x128xf32>
    %cst_13 = arith.constant dense<0.000000e+00> : vector<32x8xf32>
    %8 = tpu.matmul %2, %6, %cst_13 {dimension_numbers = #tpu.dot_dimension_numbers<[1], [0], [0], [1], [0, 0, 1, 1], [], []>} : vector<32x128xf32>, vector<128x8xf32>, vector<32x8xf32> -> vector<32x8xf32>
    %cst_14 = arith.constant 6.400000e+01 : f32
    %9 = vector.broadcast %cst_14 : f32 to vector<32x1xf32>
    %10 = arith.mulf %9, %3 : vector<32x1xf32>
    %11 = vector.broadcast %10 : vector<32x1xf32> to vector<32x8xf32>
    %12 = arith.addf %8, %11 : vector<32x8xf32>
    %13 = vector.extract_strided_slice %12 {offsets = [0, 0], sizes = [16, 8], strides = [1, 1]} : vector<32x8xf32> to vector<16x8xf32>
    %cst_15 = arith.constant dense<0.000000e+00> : vector<8xf32>
    %14 = vector.multi_reduction <add>, %13, %cst_15 [0] : vector<16x8xf32> to vector<8xf32>
    %15 = vector.shape_cast %14 : vector<8xf32> to vector<1x8xf32>
    %cst_16 = arith.constant 1.024000e+03 : f32
    %16 = vector.broadcast %cst_16 : f32 to vector<1x8xf32>
    %17 = arith.divf %15, %16 : vector<1x8xf32>
    %18 = vector.shape_cast %17 : vector<1x8xf32> to vector<1x8xf32>
    %19 = vector.broadcast %18 : vector<1x8xf32> to vector<16x8xf32>
    %20 = vector.extract_strided_slice %12 {offsets = [16, 0], sizes = [16, 8], strides = [1, 1]} : vector<32x8xf32> to vector<16x8xf32>
    %cst_17 = arith.constant dense<0.000000e+00> : vector<8xf32>
    %21 = vector.multi_reduction <add>, %20, %cst_17 [0] : vector<16x8xf32> to vector<8xf32>
    %22 = vector.shape_cast %21 : vector<8xf32> to vector<1x8xf32>
    %cst_18 = arith.constant 1.024000e+03 : f32
    %23 = vector.broadcast %cst_18 : f32 to vector<1x8xf32>
    %24 = arith.divf %22, %23 : vector<1x8xf32>
    %25 = vector.shape_cast %24 : vector<1x8xf32> to vector<1x8xf32>
    %26 = vector.broadcast %25 : vector<1x8xf32> to vector<16x8xf32>
    %27 = tpu.concatenate %19, %26 in 0 : vector<16x8xf32>, vector<16x8xf32> -> vector<32x8xf32>
    %28 = vector.broadcast %3 : vector<32x1xf32> to vector<32x8xf32>
    %29 = arith.subf %28, %27 : vector<32x8xf32>
    %cst_19 = arith.constant dense<0.000000e+00> : vector<32x128xf32>
    %30 = tpu.matmul %29, %7, %cst_19 {dimension_numbers = #tpu.dot_dimension_numbers<[1], [0], [0], [1], [0, 0, 1, 1], [], []>} : vector<32x8xf32>, vector<8x128xf32>, vector<32x128xf32> -> vector<32x128xf32>
    %31 = arith.addf %2, %30 : vector<32x128xf32>
    %32 = arith.mulf %31, %31 : vector<32x128xf32>
    %cst_20 = arith.constant dense<0.000000e+00> : vector<32x8xf32>
    %33 = tpu.matmul %32, %6, %cst_20 {dimension_numbers = #tpu.dot_dimension_numbers<[1], [0], [0], [1], [0, 0, 1, 1], [], []>} : vector<32x128xf32>, vector<128x8xf32>, vector<32x8xf32> -> vector<32x8xf32>
    %34 = vector.extract_strided_slice %33 {offsets = [0, 0], sizes = [16, 8], strides = [1, 1]} : vector<32x8xf32> to vector<16x8xf32>
    %cst_21 = arith.constant dense<0.000000e+00> : vector<8xf32>
    %35 = vector.multi_reduction <add>, %34, %cst_21 [0] : vector<16x8xf32> to vector<8xf32>
    %36 = vector.shape_cast %35 : vector<8xf32> to vector<1x8xf32>
    %cst_22 = arith.constant 1.024000e+03 : f32
    %37 = vector.broadcast %cst_22 : f32 to vector<1x8xf32>
    %38 = arith.divf %36, %37 : vector<1x8xf32>
    %cst_23 = arith.constant 9.99999974E-6 : f32
    %39 = vector.broadcast %cst_23 : f32 to vector<1x8xf32>
    %40 = arith.addf %38, %39 : vector<1x8xf32>
    %41 = math.rsqrt %40 : vector<1x8xf32>
    %42 = vector.shape_cast %41 : vector<1x8xf32> to vector<1x8xf32>
    %43 = vector.broadcast %42 : vector<1x8xf32> to vector<16x8xf32>
    %44 = vector.extract_strided_slice %33 {offsets = [16, 0], sizes = [16, 8], strides = [1, 1]} : vector<32x8xf32> to vector<16x8xf32>
    %cst_24 = arith.constant dense<0.000000e+00> : vector<8xf32>
    %45 = vector.multi_reduction <add>, %44, %cst_24 [0] : vector<16x8xf32> to vector<8xf32>
    %46 = vector.shape_cast %45 : vector<8xf32> to vector<1x8xf32>
    %cst_25 = arith.constant 1.024000e+03 : f32
    %47 = vector.broadcast %cst_25 : f32 to vector<1x8xf32>
    %48 = arith.divf %46, %47 : vector<1x8xf32>
    %cst_26 = arith.constant 9.99999974E-6 : f32
    %49 = vector.broadcast %cst_26 : f32 to vector<1x8xf32>
    %50 = arith.addf %48, %49 : vector<1x8xf32>
    %51 = math.rsqrt %50 : vector<1x8xf32>
    %52 = vector.shape_cast %51 : vector<1x8xf32> to vector<1x8xf32>
    %53 = vector.broadcast %52 : vector<1x8xf32> to vector<16x8xf32>
    %54 = tpu.concatenate %43, %53 in 0 : vector<16x8xf32>, vector<16x8xf32> -> vector<32x8xf32>
    %55 = vector.broadcast %4 : vector<32x1xf32> to vector<32x8xf32>
    %56 = arith.mulf %55, %54 : vector<32x8xf32>
    %cst_27 = arith.constant dense<0.000000e+00> : vector<32x128xf32>
    %57 = tpu.matmul %56, %7, %cst_27 {dimension_numbers = #tpu.dot_dimension_numbers<[1], [0], [0], [1], [0, 0, 1, 1], [], []>} : vector<32x8xf32>, vector<8x128xf32>, vector<32x128xf32> -> vector<32x128xf32>
    %58 = arith.mulf %31, %57 : vector<32x128xf32>
    %59 = vector.broadcast %5 : vector<32x1xf32> to vector<32x128xf32>
    %60 = arith.addf %58, %59 : vector<32x128xf32>
    %61 = arith.negf %60 : vector<32x128xf32>
    %62 = math.exp %61 : vector<32x128xf32>
    %cst_28 = arith.constant 1.000000e+00 : f32
    %63 = vector.broadcast %cst_28 : f32 to vector<32x128xf32>
    %64 = arith.addf %63, %62 : vector<32x128xf32>
    %65 = arith.divf %63, %64 : vector<32x128xf32>
    %66 = arith.mulf %60, %65 : vector<32x128xf32>
    %c0_29 = arith.constant 0 : index
    %c0_30 = arith.constant 0 : index
    %67 = vector.load %arg8[%c0_29, %c0_30] : memref<32x128xf32, #tpu.memory_space<vmem>>, vector<32x128xf32>
    tpu.vector_store %arg8[%c0_29, %c0_30], %66 {strides = array<i32>} : memref<32x128xf32, #tpu.memory_space<vmem>>, vector<32x128xf32>,
    return
  }
  func.func @transform_0(%arg0: i32) -> (i32, i32) {
    %c0_i32 = arith.constant 0 : i32
    %c0_i32_0 = arith.constant 0 : i32
    %c0_i32_1 = arith.constant 0 : i32
    return %c0_i32, %c0_i32_0 : i32, i32
  }
  func.func @transform_1(%arg0: i32) -> (i32, i32) {
    %c0_i32 = arith.constant 0 : i32
    %c0_i32_0 = arith.constant 0 : i32
    %c0_i32_1 = arith.constant 0 : i32
    return %c0_i32, %c0_i32_0 : i32, i32
  }
  func.func @transform_2(%arg0: i32) -> (i32, i32) {
    %c0_i32 = arith.constant 0 : i32
    %c0_i32_0 = arith.constant 0 : i32
    %c0_i32_1 = arith.constant 0 : i32
    return %c0_i32, %c0_i32_0 : i32, i32
  }
  func.func @transform_3(%arg0: i32) -> (i32, i32) {
    %c0_i32 = arith.constant 0 : i32
    %c0_i32_0 = arith.constant 0 : i32
    %c0_i32_1 = arith.constant 0 : i32
    return %c0_i32, %c0_i32_0 : i32, i32
  }
  func.func @transform_4(%arg0: i32) -> (i32, i32) {
    %c0_i32 = arith.constant 0 : i32
    %c0_i32_0 = arith.constant 0 : i32
    %c0_i32_1 = arith.constant 0 : i32
    return %c0_i32, %c0_i32_0 : i32, i32
  }
  func.func @transform_5(%arg0: i32) -> (i32, i32) {
    %c0_i32 = arith.constant 0 : i32
    %c0_i32_0 = arith.constant 0 : i32
    %c0_i32_1 = arith.constant 0 : i32
    return %c0_i32, %c0_i32_0 : i32, i32
  }
  func.func @transform_6(%arg0: i32) -> (i32, i32) {
    %c0_i32 = arith.constant 0 : i32
    %c0_i32_0 = arith.constant 0 : i32
    %c0_i32_1 = arith.constant 0 : i32
    return %c0_i32, %c0_i32_0 : i32, i32
  }
  func.func @transform_7(%arg0: i32) -> (i32, i32) {
    %c0_i32 = arith.constant 0 : i32
    %c0_i32_0 = arith.constant 0 : i32
    %c0_i32_1 = arith.constant 0 : i32
    return %c0_i32, %c0_i32_0 : i32, i32
  }
}

module attributes {stable_mosaic.version = 11 : i64} {
  func.func @_last_layer_kernel(%arg0: i32, %arg1: memref<128x512xf32, #tpu.memory_space<vmem>>, %arg2: memref<8x128xf32, #tpu.memory_space<vmem>>, %arg3: memref<8x1xf32, #tpu.memory_space<vmem>>, %arg4: memref<8x1xf32, #tpu.memory_space<vmem>>, %arg5: memref<8x1xf32, #tpu.memory_space<vmem>>, %arg6: memref<512x8xf32, #tpu.memory_space<vmem>>, %arg7: memref<8x512xf32, #tpu.memory_space<vmem>>, %arg8: memref<4x8xf32, #tpu.memory_space<vmem>>, %arg9: memref<4x1xf32, #tpu.memory_space<vmem>>, %arg10: memref<4x512xf32, #tpu.memory_space<vmem>>) attributes {dimension_semantics = [#tpu.dimension_semantics<arbitrary>], iteration_bounds = array<i64: 1>, scalar_prefetch = 0 : i64, scratch_operands = 0 : i64, tpu.core_type = #tpu.core_type<tc>, window_params = [{pipeline_mode = #tpu.pipeline_mode<synchronous>, transform_indices = @transform_0, window_bounds = array<i64: 128, 512>}, {pipeline_mode = #tpu.pipeline_mode<synchronous>, transform_indices = @transform_1, window_bounds = array<i64: 8, 128>}, {pipeline_mode = #tpu.pipeline_mode<synchronous>, transform_indices = @transform_2, window_bounds = array<i64: 8, 1>}, {pipeline_mode = #tpu.pipeline_mode<synchronous>, transform_indices = @transform_3, window_bounds = array<i64: 8, 1>}, {pipeline_mode = #tpu.pipeline_mode<synchronous>, transform_indices = @transform_4, window_bounds = array<i64: 8, 1>}, {pipeline_mode = #tpu.pipeline_mode<synchronous>, transform_indices = @transform_5, window_bounds = array<i64: 512, 8>}, {pipeline_mode = #tpu.pipeline_mode<synchronous>, transform_indices = @transform_6, window_bounds = array<i64: 8, 512>}, {pipeline_mode = #tpu.pipeline_mode<synchronous>, transform_indices = @transform_7, window_bounds = array<i64: 4, 8>}, {pipeline_mode = #tpu.pipeline_mode<synchronous>, transform_indices = @transform_8, window_bounds = array<i64: 4, 1>}, {pipeline_mode = #tpu.pipeline_mode<synchronous>, transform_indices = @transform_9, window_bounds = array<i64: 4, 512>}]} {
    %c0 = arith.constant 0 : index
    %c0_0 = arith.constant 0 : index
    %0 = vector.load %arg2[%c0, %c0_0] : memref<8x128xf32, #tpu.memory_space<vmem>>, vector<8x128xf32>
    %c0_1 = arith.constant 0 : index
    %c0_2 = arith.constant 0 : index
    %1 = vector.load %arg1[%c0_1, %c0_2] : memref<128x512xf32, #tpu.memory_space<vmem>>, vector<128x512xf32>
    %cst = arith.constant dense<0.000000e+00> : vector<8x512xf32>
    %2 = tpu.matmul %0, %1, %cst {dimension_numbers = #tpu.dot_dimension_numbers<[1], [0], [0], [1], [0, 0, 1, 1], [], []>} : vector<8x128xf32>, vector<128x512xf32>, vector<8x512xf32> -> vector<8x512xf32>
    %c0_3 = arith.constant 0 : index
    %c0_4 = arith.constant 0 : index
    %3 = vector.load %arg3[%c0_3, %c0_4] : memref<8x1xf32, #tpu.memory_space<vmem>>, vector<8x1xf32>
    %c0_5 = arith.constant 0 : index
    %c0_6 = arith.constant 0 : index
    %4 = vector.load %arg4[%c0_5, %c0_6] : memref<8x1xf32, #tpu.memory_space<vmem>>, vector<8x1xf32>
    %c0_7 = arith.constant 0 : index
    %c0_8 = arith.constant 0 : index
    %5 = vector.load %arg5[%c0_7, %c0_8] : memref<8x1xf32, #tpu.memory_space<vmem>>, vector<8x1xf32>
    %c0_9 = arith.constant 0 : index
    %c0_10 = arith.constant 0 : index
    %6 = vector.load %arg6[%c0_9, %c0_10] : memref<512x8xf32, #tpu.memory_space<vmem>>, vector<512x8xf32>
    %c0_11 = arith.constant 0 : index
    %c0_12 = arith.constant 0 : index
    %7 = vector.load %arg7[%c0_11, %c0_12] : memref<8x512xf32, #tpu.memory_space<vmem>>, vector<8x512xf32>
    %cst_13 = arith.constant dense<0.000000e+00> : vector<8x8xf32>
    %8 = tpu.matmul %2, %6, %cst_13 {dimension_numbers = #tpu.dot_dimension_numbers<[1], [0], [0], [1], [0, 0, 1, 1], [], []>} : vector<8x512xf32>, vector<512x8xf32>, vector<8x8xf32> -> vector<8x8xf32>
    %cst_14 = arith.constant 2.560000e+02 : f32
    %9 = vector.broadcast %cst_14 : f32 to vector<8x1xf32>
    %10 = arith.mulf %9, %3 : vector<8x1xf32>
    %11 = vector.broadcast %10 : vector<8x1xf32> to vector<8x8xf32>
    %12 = arith.addf %8, %11 : vector<8x8xf32>
    %13 = vector.extract_strided_slice %12 {offsets = [0, 0], sizes = [4, 8], strides = [1, 1]} : vector<8x8xf32> to vector<4x8xf32>
    %cst_15 = arith.constant dense<0.000000e+00> : vector<8xf32>
    %14 = vector.multi_reduction <add>, %13, %cst_15 [0] : vector<4x8xf32> to vector<8xf32>
    %15 = vector.shape_cast %14 : vector<8xf32> to vector<1x8xf32>
    %cst_16 = arith.constant 1.024000e+03 : f32
    %16 = vector.broadcast %cst_16 : f32 to vector<1x8xf32>
    %17 = arith.divf %15, %16 : vector<1x8xf32>
    %18 = vector.shape_cast %17 : vector<1x8xf32> to vector<1x8xf32>
    %19 = vector.broadcast %18 : vector<1x8xf32> to vector<4x8xf32>
    %20 = vector.extract_strided_slice %12 {offsets = [4, 0], sizes = [4, 8], strides = [1, 1]} : vector<8x8xf32> to vector<4x8xf32>
    %cst_17 = arith.constant dense<0.000000e+00> : vector<8xf32>
    %21 = vector.multi_reduction <add>, %20, %cst_17 [0] : vector<4x8xf32> to vector<8xf32>
    %22 = vector.shape_cast %21 : vector<8xf32> to vector<1x8xf32>
    %cst_18 = arith.constant 1.024000e+03 : f32
    %23 = vector.broadcast %cst_18 : f32 to vector<1x8xf32>
    %24 = arith.divf %22, %23 : vector<1x8xf32>
    %25 = vector.shape_cast %24 : vector<1x8xf32> to vector<1x8xf32>
    %26 = vector.broadcast %25 : vector<1x8xf32> to vector<4x8xf32>
    %27 = tpu.concatenate %19, %26 in 0 : vector<4x8xf32>, vector<4x8xf32> -> vector<8x8xf32>
    %28 = vector.broadcast %3 : vector<8x1xf32> to vector<8x8xf32>
    %29 = arith.subf %28, %27 : vector<8x8xf32>
    %cst_19 = arith.constant dense<0.000000e+00> : vector<8x512xf32>
    %30 = tpu.matmul %29, %7, %cst_19 {dimension_numbers = #tpu.dot_dimension_numbers<[1], [0], [0], [1], [0, 0, 1, 1], [], []>} : vector<8x8xf32>, vector<8x512xf32>, vector<8x512xf32> -> vector<8x512xf32>
    %31 = arith.addf %2, %30 : vector<8x512xf32>
    %32 = arith.mulf %31, %31 : vector<8x512xf32>
    %cst_20 = arith.constant dense<0.000000e+00> : vector<8x8xf32>
    %33 = tpu.matmul %32, %6, %cst_20 {dimension_numbers = #tpu.dot_dimension_numbers<[1], [0], [0], [1], [0, 0, 1, 1], [], []>} : vector<8x512xf32>, vector<512x8xf32>, vector<8x8xf32> -> vector<8x8xf32>
    %34 = vector.extract_strided_slice %33 {offsets = [0, 0], sizes = [4, 8], strides = [1, 1]} : vector<8x8xf32> to vector<4x8xf32>
    %cst_21 = arith.constant dense<0.000000e+00> : vector<8xf32>
    %35 = vector.multi_reduction <add>, %34, %cst_21 [0] : vector<4x8xf32> to vector<8xf32>
    %36 = vector.shape_cast %35 : vector<8xf32> to vector<1x8xf32>
    %cst_22 = arith.constant 1.024000e+03 : f32
    %37 = vector.broadcast %cst_22 : f32 to vector<1x8xf32>
    %38 = arith.divf %36, %37 : vector<1x8xf32>
    %cst_23 = arith.constant 9.99999974E-6 : f32
    %39 = vector.broadcast %cst_23 : f32 to vector<1x8xf32>
    %40 = arith.addf %38, %39 : vector<1x8xf32>
    %41 = math.rsqrt %40 : vector<1x8xf32>
    %42 = vector.shape_cast %41 : vector<1x8xf32> to vector<1x8xf32>
    %43 = vector.broadcast %42 : vector<1x8xf32> to vector<4x8xf32>
    %44 = vector.extract_strided_slice %33 {offsets = [4, 0], sizes = [4, 8], strides = [1, 1]} : vector<8x8xf32> to vector<4x8xf32>
    %cst_24 = arith.constant dense<0.000000e+00> : vector<8xf32>
    %45 = vector.multi_reduction <add>, %44, %cst_24 [0] : vector<4x8xf32> to vector<8xf32>
    %46 = vector.shape_cast %45 : vector<8xf32> to vector<1x8xf32>
    %cst_25 = arith.constant 1.024000e+03 : f32
    %47 = vector.broadcast %cst_25 : f32 to vector<1x8xf32>
    %48 = arith.divf %46, %47 : vector<1x8xf32>
    %cst_26 = arith.constant 9.99999974E-6 : f32
    %49 = vector.broadcast %cst_26 : f32 to vector<1x8xf32>
    %50 = arith.addf %48, %49 : vector<1x8xf32>
    %51 = math.rsqrt %50 : vector<1x8xf32>
    %52 = vector.shape_cast %51 : vector<1x8xf32> to vector<1x8xf32>
    %53 = vector.broadcast %52 : vector<1x8xf32> to vector<4x8xf32>
    %54 = tpu.concatenate %43, %53 in 0 : vector<4x8xf32>, vector<4x8xf32> -> vector<8x8xf32>
    %55 = vector.broadcast %4 : vector<8x1xf32> to vector<8x8xf32>
    %56 = arith.mulf %55, %54 : vector<8x8xf32>
    %cst_27 = arith.constant dense<0.000000e+00> : vector<8x512xf32>
    %57 = tpu.matmul %56, %7, %cst_27 {dimension_numbers = #tpu.dot_dimension_numbers<[1], [0], [0], [1], [0, 0, 1, 1], [], []>} : vector<8x8xf32>, vector<8x512xf32>, vector<8x512xf32> -> vector<8x512xf32>
    %58 = arith.mulf %31, %57 : vector<8x512xf32>
    %59 = vector.broadcast %5 : vector<8x1xf32> to vector<8x512xf32>
    %60 = arith.addf %58, %59 : vector<8x512xf32>
    %61 = arith.negf %60 : vector<8x512xf32>
    %62 = math.exp %61 : vector<8x512xf32>
    %cst_28 = arith.constant 1.000000e+00 : f32
    %63 = vector.broadcast %cst_28 : f32 to vector<8x512xf32>
    %64 = arith.addf %63, %62 : vector<8x512xf32>
    %65 = arith.divf %63, %64 : vector<8x512xf32>
    %66 = arith.mulf %60, %65 : vector<8x512xf32>
    %c0_29 = arith.constant 0 : index
    %c0_30 = arith.constant 0 : index
    %67 = vector.load %arg8[%c0_29, %c0_30] : memref<4x8xf32, #tpu.memory_space<vmem>>, vector<4x8xf32>
    %cst_31 = arith.constant dense<0.000000e+00> : vector<4x512xf32>
    %68 = tpu.matmul %67, %66, %cst_31 {dimension_numbers = #tpu.dot_dimension_numbers<[1], [0], [0], [1], [0, 0, 1, 1], [], []>} : vector<4x8xf32>, vector<8x512xf32>, vector<4x512xf32> -> vector<4x512xf32>
    %c0_32 = arith.constant 0 : index
    %c0_33 = arith.constant 0 : index
    %69 = vector.load %arg9[%c0_32, %c0_33] : memref<4x1xf32, #tpu.memory_space<vmem>>, vector<4x1xf32>
    %70 = vector.broadcast %69 : vector<4x1xf32> to vector<4x512xf32>
    %71 = arith.addf %68, %70 : vector<4x512xf32>
    %c0_34 = arith.constant 0 : index
    %c0_35 = arith.constant 0 : index
    %72 = vector.load %arg10[%c0_34, %c0_35] : memref<4x512xf32, #tpu.memory_space<vmem>>, vector<4x512xf32>
    tpu.vector_store %arg10[%c0_34, %c0_35], %71 {strides = array<i32>} : memref<4x512xf32, #tpu.memory_space<vmem>>, vector<4x512xf32>,
    return
  }
  func.func @transform_0(%arg0: i32) -> (i32, i32) {
    %c0_i32 = arith.constant 0 : i32
    %c0_i32_0 = arith.constant 0 : i32
    %c0_i32_1 = arith.constant 0 : i32
    return %c0_i32, %c0_i32_0 : i32, i32
  }
  func.func @transform_1(%arg0: i32) -> (i32, i32) {
    %c0_i32 = arith.constant 0 : i32
    %c0_i32_0 = arith.constant 0 : i32
    %c0_i32_1 = arith.constant 0 : i32
    return %c0_i32, %c0_i32_0 : i32, i32
  }
  func.func @transform_2(%arg0: i32) -> (i32, i32) {
    %c0_i32 = arith.constant 0 : i32
    %c0_i32_0 = arith.constant 0 : i32
    %c0_i32_1 = arith.constant 0 : i32
    return %c0_i32, %c0_i32_0 : i32, i32
  }
  func.func @transform_3(%arg0: i32) -> (i32, i32) {
    %c0_i32 = arith.constant 0 : i32
    %c0_i32_0 = arith.constant 0 : i32
    %c0_i32_1 = arith.constant 0 : i32
    return %c0_i32, %c0_i32_0 : i32, i32
  }
  func.func @transform_4(%arg0: i32) -> (i32, i32) {
    %c0_i32 = arith.constant 0 : i32
    %c0_i32_0 = arith.constant 0 : i32
    %c0_i32_1 = arith.constant 0 : i32
    return %c0_i32, %c0_i32_0 : i32, i32
  }
  func.func @transform_5(%arg0: i32) -> (i32, i32) {
    %c0_i32 = arith.constant 0 : i32
    %c0_i32_0 = arith.constant 0 : i32
    %c0_i32_1 = arith.constant 0 : i32
    return %c0_i32, %c0_i32_0 : i32, i32
  }
  func.func @transform_6(%arg0: i32) -> (i32, i32) {
    %c0_i32 = arith.constant 0 : i32
    %c0_i32_0 = arith.constant 0 : i32
    %c0_i32_1 = arith.constant 0 : i32
    return %c0_i32, %c0_i32_0 : i32, i32
  }
  func.func @transform_7(%arg0: i32) -> (i32, i32) {
    %c0_i32 = arith.constant 0 : i32
    %c0_i32_0 = arith.constant 0 : i32
    %c0_i32_1 = arith.constant 0 : i32
    return %c0_i32, %c0_i32_0 : i32, i32
  }
  func.func @transform_8(%arg0: i32) -> (i32, i32) {
    %c0_i32 = arith.constant 0 : i32
    %c0_i32_0 = arith.constant 0 : i32
    %c0_i32_1 = arith.constant 0 : i32
    return %c0_i32, %c0_i32_0 : i32, i32
  }
  func.func @transform_9(%arg0: i32) -> (i32, i32) {
    %c0_i32 = arith.constant 0 : i32
    %c0_i32_0 = arith.constant 0 : i32
    %c0_i32_1 = arith.constant 0 : i32
    return %c0_i32, %c0_i32_0 : i32, i32
  }
}

</mosaic_0001>

<llo_original>
// kernel: decoder_forward.2
$region0: #{decoder_forward.2}
  #allocation0 [shape = 'u32[]', space=smem, size = 0x4, offset = 0x4, fixed_abs, tag = 'smem constant byte address 0x4 - core index']
  #allocation1 [shape = 'u32[72,128]{1,0:T(1,128)}', space=vmem, size = 0x9000, scoped, tag = 'internal scratch']
  %s0 = inlined_call_operand.vmem [shape: f32[128,128], index: 0, kind: input, shape index: {}]
  %s1 = inlined_call_operand.vmem [shape: f32[32,128], index: 1, kind: input, shape index: {}]
  %s2 = inlined_call_operand.vmem [shape: f32[32,1], index: 2, kind: input, shape index: {}]
  %s3 = inlined_call_operand.vmem [shape: f32[32,1], index: 3, kind: input, shape index: {}]
  %s4 = inlined_call_operand.vmem [shape: f32[32,1], index: 4, kind: input, shape index: {}]
  %s5 = inlined_call_operand.vmem [shape: f32[128,8], index: 5, kind: input, shape index: {}]
  %s6 = inlined_call_operand.vmem [shape: f32[8,128], index: 6, kind: input, shape index: {}]
  %s7 = inlined_call_operand.vmem [shape: f32[32,128], index: 7, kind: output, shape index: {}]
  %s8 = sld [smem:[#allocation0]]
  $region38: #{decoder_forward.2} parent=0
    _
  %s10 = ssub.s32 1, %s8
  %s11 = scalar_select 0, %s10, %s8
  // Predicated region
  $region2: #{decoder_forward.2} parent=0 // pred_check
    _
  $region3: #{decoder_forward.2} parent=0 // pred_check_branch
    %13 = sbr.rel (0) target = $region5
  $region4: #{decoder_forward.2} parent=0 // pred_region
    _
  $region5: #{decoder_forward.2} parent=0 // pred_fallthru
    _
  // Predicated region
  $region6: #{decoder_forward.2} parent=0 // pred_check
    _
  $region7: #{decoder_forward.2} parent=0 // pred_check_branch
    %15 = sbr.rel (0) target = $region9
  $region8: #{decoder_forward.2} parent=0 // pred_region
    _
  $region9: #{decoder_forward.2} parent=0 // pred_fallthru
    _
  // Predicated region
  $region10: #{decoder_forward.2} parent=0 // pred_check
    _
  $region11: #{decoder_forward.2} parent=0 // pred_check_branch
    %17 = sbr.rel (0) target = $region13
  $region12: #{decoder_forward.2} parent=0 // pred_region
    _
  $region13: #{decoder_forward.2} parent=0 // pred_fallthru
    _
  // Predicated region
  $region14: #{decoder_forward.2} parent=0 // pred_check
    _
  $region15: #{decoder_forward.2} parent=0 // pred_check_branch
    %19 = sbr.rel (0) target = $region17
  $region16: #{decoder_forward.2} parent=0 // pred_region
    _
  $region17: #{decoder_forward.2} parent=0 // pred_fallthru
    _
  // Predicated region
  $region18: #{decoder_forward.2} parent=0 // pred_check
    _
  $region19: #{decoder_forward.2} parent=0 // pred_check_branch
    %21 = sbr.rel (0) target = $region21
  $region20: #{decoder_forward.2} parent=0 // pred_region
    _
  $region21: #{decoder_forward.2} parent=0 // pred_fallthru
    _
  // Predicated region
  $region22: #{decoder_forward.2} parent=0 // pred_check
    _
  $region23: #{decoder_forward.2} parent=0 // pred_check_branch
    %23 = sbr.rel (0) target = $region25
  $region24: #{decoder_forward.2} parent=0 // pred_region
    _
  $region25: #{decoder_forward.2} parent=0 // pred_fallthru
    _
  // Predicated region
  $region26: #{decoder_forward.2} parent=0 // pred_check
    _
  $region27: #{decoder_forward.2} parent=0 // pred_check_branch
    %25 = sbr.rel (0) target = $region29
  $region28: #{decoder_forward.2} parent=0 // pred_region
    _
  $region29: #{decoder_forward.2} parent=0 // pred_fallthru
    _
  %v26 = vld [vmem:[%s1] sm:$0xff]
  %v27 = vld [vmem:[%s1 + $0x8] sm:$0xff]
  %v28 = vld [vmem:[%s1 + $0x10] sm:$0xff]
  %v29 = vld [vmem:[%s1 + $0x18] sm:$0xff]
  %v30 = vld [vmem:[%s0] sm:$0xff]
  %v31 = vld [vmem:[%s0 + $0x8] sm:$0xff]
  %v32 = vld [vmem:[%s0 + $0x10] sm:$0xff]
  %v33 = vld [vmem:[%s0 + $0x18] sm:$0xff]
  %v34 = vld [vmem:[%s0 + $0x20] sm:$0xff]
  %v35 = vld [vmem:[%s0 + $0x28] sm:$0xff]
  %v36 = vld [vmem:[%s0 + $0x30] sm:$0xff]
  %v37 = vld [vmem:[%s0 + $0x38] sm:$0xff]
  %v38 = vld [vmem:[%s0 + $0x40] sm:$0xff]
  %v39 = vld [vmem:[%s0 + $0x48] sm:$0xff]
  %v40 = vld [vmem:[%s0 + $0x50] sm:$0xff]
  %v41 = vld [vmem:[%s0 + $0x58] sm:$0xff]
  %v42 = vld [vmem:[%s0 + $0x60] sm:$0xff]
  %v43 = vld [vmem:[%s0 + $0x68] sm:$0xff]
  %v44 = vld [vmem:[%s0 + $0x70] sm:$0xff]
  %v45 = vld [vmem:[%s0 + $0x78] sm:$0xff]
  %46 = vmatpush.msra.mxu0 %v45
  %47 = vmatpush.msra.mxu0 %v44
  %48 = vmatpush.msra.mxu0 %v43
  %49 = vmatpush.msra.mxu0 %v42
  %50 = vmatpush.msra.mxu0 %v41
  %51 = vmatpush.msra.mxu0 %v40
  %52 = vmatpush.msra.mxu0 %v39
  %53 = vmatpush.msra.mxu0 %v38
  %54 = vmatpush.msra.mxu0 %v37
  %55 = vmatpush.msra.mxu0 %v36
  %56 = vmatpush.msra.mxu0 %v35
  %57 = vmatpush.msra.mxu0 %v34
  %58 = vmatpush.msra.mxu0 %v33
  %59 = vmatpush.msra.mxu0 %v32
  %60 = vmatpush.msra.mxu0 %v31
  %61 = vmatpush.msra.mxu0 %v30
  %62 = vmatmul.f32.gmra.mxu0 %v26
  %v63 = vpop.f32.mrf.mxu0
  %v64 = vadd.f32 0.0, %v63
  %65 = vmatmul.f32.gmra.mxu0 %v27
  %v66 = vpop.f32.mrf.mxu0
  %v67 = vadd.f32 0.0, %v66
  %68 = vmatmul.f32.gmra.mxu0 %v28
  %v69 = vpop.f32.mrf.mxu0
  %v70 = vadd.f32 0.0, %v69
  %71 = vmatmul.f32.gmra.mxu0 %v29
  %v72 = vpop.f32.mrf.mxu0
  %v73 = vadd.f32 0.0, %v72
  %74 = vdwg.mxu0
  %v75 = vld [vmem:[%s2] sm:$0xff]
  %v76 = vld [vmem:[%s2 + $0x8] sm:$0xff]
  %v77 = vld [vmem:[%s2 + $0x10] sm:$0xff]
  %v78 = vld [vmem:[%s2 + $0x18] sm:$0xff]
  %v79 = vld [vmem:[%s3] sm:$0xff]
  %v80 = vld [vmem:[%s3 + $0x8] sm:$0xff]
  %v81 = vld [vmem:[%s3 + $0x10] sm:$0xff]
  %v82 = vld [vmem:[%s3 + $0x18] sm:$0xff]
  %v83 = vld [vmem:[%s4] sm:$0xff]
  %v84 = vld [vmem:[%s4 + $0x8] sm:$0xff]
  %v85 = vld [vmem:[%s4 + $0x10] sm:$0xff]
  %v86 = vld [vmem:[%s4 + $0x18] sm:$0xff]
  %v87 = vld [vmem:[%s5] sm:$0xff]
  %v88 = vld [vmem:[%s5 + $0x8] sm:$0xff]
  %v89 = vld [vmem:[%s5 + $0x10] sm:$0xff]
  %v90 = vld [vmem:[%s5 + $0x18] sm:$0xff]
  %v91 = vld [vmem:[%s5 + $0x20] sm:$0xff]
  %v92 = vld [vmem:[%s5 + $0x28] sm:$0xff]
  %v93 = vld [vmem:[%s5 + $0x30] sm:$0xff]
  %v94 = vld [vmem:[%s5 + $0x38] sm:$0xff]
  %v95 = vld [vmem:[%s5 + $0x40] sm:$0xff]
  %v96 = vld [vmem:[%s5 + $0x48] sm:$0xff]
  %v97 = vld [vmem:[%s5 + $0x50] sm:$0xff]
  %v98 = vld [vmem:[%s5 + $0x58] sm:$0xff]
  %v99 = vld [vmem:[%s5 + $0x60] sm:$0xff]
  %v100 = vld [vmem:[%s5 + $0x68] sm:$0xff]
  %v101 = vld [vmem:[%s5 + $0x70] sm:$0xff]
  %v102 = vld [vmem:[%s5 + $0x78] sm:$0xff]
  %v103 = vld [vmem:[%s6] sm:$0xff]
  %v104 = vmul.f32 %v75, 64.0
  %v105 = vmul.f32 %v76, 64.0
  %v106 = vmul.f32 %v77, 64.0
  %v107 = vmul.f32 %v78, 64.0
  %109 = vset.pattern.permute.xlu0 0
  %110 = vperm.xlu0 %109, %v104
  %v111 = vpop.permute.xlu0 %110
  %114 = vset.pattern.permute.xlu0 0
  %115 = vperm.xlu0 %114, %v105
  %v116 = vpop.permute.xlu0 %115
  %119 = vset.pattern.permute.xlu0 0
  %120 = vperm.xlu0 %119, %v106
  %v121 = vpop.permute.xlu0 %120
  %124 = vset.pattern.permute.xlu0 0
  %125 = vperm.xlu0 %124, %v107
  %v126 = vpop.permute.xlu0 %125
  %128 = vmatpush.msra.mxu0 %v102
  %129 = vmatpush.msra.mxu0 %v101
  %130 = vmatpush.msra.mxu0 %v100
  %131 = vmatpush.msra.mxu0 %v99
  %132 = vmatpush.msra.mxu0 %v98
  %133 = vmatpush.msra.mxu0 %v97
  %134 = vmatpush.msra.mxu0 %v96
  %135 = vmatpush.msra.mxu0 %v95
  %136 = vmatpush.msra.mxu0 %v94
  %137 = vmatpush.msra.mxu0 %v93
  %138 = vmatpush.msra.mxu0 %v92
  %139 = vmatpush.msra.mxu0 %v91
  %140 = vmatpush.msra.mxu0 %v90
  %141 = vmatpush.msra.mxu0 %v89
  %142 = vmatpush.msra.mxu0 %v88
  %143 = vmatpush.msra.mxu0 %v87
  %144 = vmatmul.f32.gmra.mxu0 %v64
  %v145 = vpop.f32.mrf.mxu0
  %v146 = vadd.f32 %v111, %v145
  %147 = vmatmul.f32.gmra.mxu0 %v67
  %v148 = vpop.f32.mrf.mxu0
  %v149 = vadd.f32 %v116, %v148
  %150 = vmatmul.f32.gmra.mxu0 %v70
  %v151 = vpop.f32.mrf.mxu0
  %v152 = vadd.f32 %v121, %v151
  %153 = vmatmul.f32.gmra.mxu0 %v73
  %v154 = vpop.f32.mrf.mxu0
  %v155 = vadd.f32 %v126, %v154
  %156 = vdwg.mxu0
  %vm157 = vcmask 64512
  %v158 = vsel %vm157, %v146, 0.0
  %v159 = vsel %vm157, %v149, 0.0
  %v160 = vadd.f32 %v158, %v159
  %v161 = vrot.slane %v160, 4
  %v162 = vadd.f32 %v160, %v161
  %v163 = vrot.slane %v162, 2
  %v164 = vadd.f32 %v162, %v163
  %v165 = vrot.slane %v164, 1
  %v166 = vadd.f32 %v164, %v165
  %v167 = vrcp.pop 1024.0
  %v168 = vmul.f32 1024.0, %v167
  %v169 = vsub.f32 1.0, %v168
  %v170 = vmul.f32 %v167, %v169
  %v171 = vadd.f32 %v167, %v170
  %vm172 = vweird.f32 %v167
  %v173 = vsel %vm172, %v167, %v171
  %v174 = vmul.f32 %v166, %v173
  %v175 = vsel %vm157, %v152, 0.0
  %v176 = vsel %vm157, %v155, 0.0
  %v177 = vadd.f32 %v175, %v176
  %v178 = vrot.slane %v177, 4
  %v179 = vadd.f32 %v177, %v178
  %v180 = vrot.slane %v179, 2
  %v181 = vadd.f32 %v179, %v180
  %v182 = vrot.slane %v181, 1
  %v183 = vadd.f32 %v181, %v182
  %v184 = vmul.f32 %v183, %v173
  %186 = vset.pattern.permute.xlu0 0
  %187 = vperm.xlu0 %186, %v75
  %v188 = vpop.permute.xlu0 %187
  %191 = vset.pattern.permute.xlu0 0
  %192 = vperm.xlu0 %191, %v76
  %v193 = vpop.permute.xlu0 %192
  %196 = vset.pattern.permute.xlu0 0
  %197 = vperm.xlu0 %196, %v77
  %v198 = vpop.permute.xlu0 %197
  %201 = vset.pattern.permute.xlu0 0
  %202 = vperm.xlu0 %201, %v78
  %v203 = vpop.permute.xlu0 %202
  %v205 = vsub.f32 %v188, %v174
  %v206 = vsub.f32 %v193, %v174
  %v207 = vsub.f32 %v198, %v184
  %v208 = vsub.f32 %v203, %v184
  %v210 = vsel %vm157, %v205, 0
  %v213 = vsel %vm157, %v206, 0
  %v216 = vsel %vm157, %v207, 0
  %v219 = vsel %vm157, %v208, 0
  %221 = vmatpush.msra.mxu0 0.0
  %222 = vmatpush.msra.mxu0 0.0
  %223 = vmatpush.msra.mxu0 0.0
  %224 = vmatpush.msra.mxu0 0.0
  %225 = vmatpush.msra.mxu0 0.0
  %226 = vmatpush.msra.mxu0 0.0
  %227 = vmatpush.msra.mxu0 0.0
  %228 = vmatpush.msra.mxu0 0.0
  %229 = vmatpush.msra.mxu0 0.0
  %230 = vmatpush.msra.mxu0 0.0
  %231 = vmatpush.msra.mxu0 0.0
  %232 = vmatpush.msra.mxu0 0.0
  %233 = vmatpush.msra.mxu0 0.0
  %234 = vmatpush.msra.mxu0 0.0
  %235 = vmatpush.msra.mxu0 0.0
  %236 = vmatpush.msra.mxu0 %v103
  %237 = vmatmul.f32.gmra.mxu0 %v210
  %v238 = vpop.f32.mrf.mxu0
  %v239 = vadd.f32 0.0, %v238
  %240 = vmatmul.f32.gmra.mxu0 %v213
  %v241 = vpop.f32.mrf.mxu0
  %v242 = vadd.f32 0.0, %v241
  %243 = vmatmul.f32.gmra.mxu0 %v216
  %v244 = vpop.f32.mrf.mxu0
  %v245 = vadd.f32 0.0, %v244
  %246 = vmatmul.f32.gmra.mxu0 %v219
  %v247 = vpop.f32.mrf.mxu0
  %v248 = vadd.f32 0.0, %v247
  %249 = vdwg.mxu0
  %v250 = vadd.f32 %v64, %v239
  %v251 = vadd.f32 %v67, %v242
  %v252 = vadd.f32 %v70, %v245
  %v253 = vadd.f32 %v73, %v248
  %v254 = vmul.f32 %v250, %v250
  %v255 = vmul.f32 %v251, %v251
  %v256 = vmul.f32 %v252, %v252
  %v257 = vmul.f32 %v253, %v253
  %258 = vmatpush.msra.mxu0 %v102
  %259 = vmatpush.msra.mxu0 %v101
  %260 = vmatpush.msra.mxu0 %v100
  %261 = vmatpush.msra.mxu0 %v99
  %262 = vmatpush.msra.mxu0 %v98
  %263 = vmatpush.msra.mxu0 %v97
  %264 = vmatpush.msra.mxu0 %v96
  %265 = vmatpush.msra.mxu0 %v95
  %266 = vmatpush.msra.mxu0 %v94
  %267 = vmatpush.msra.mxu0 %v93
  %268 = vmatpush.msra.mxu0 %v92
  %269 = vmatpush.msra.mxu0 %v91
  %270 = vmatpush.msra.mxu0 %v90
  %271 = vmatpush.msra.mxu0 %v89
  %272 = vmatpush.msra.mxu0 %v88
  %273 = vmatpush.msra.mxu0 %v87
  %274 = vmatmul.f32.gmra.mxu0 %v254
  %v275 = vpop.f32.mrf.mxu0
  %v276 = vadd.f32 0.0, %v275
  %277 = vmatmul.f32.gmra.mxu0 %v255
  %v278 = vpop.f32.mrf.mxu0
  %v279 = vadd.f32 0.0, %v278
  %280 = vmatmul.f32.gmra.mxu0 %v256
  %v281 = vpop.f32.mrf.mxu0
  %v282 = vadd.f32 0.0, %v281
  %283 = vmatmul.f32.gmra.mxu0 %v257
  %v284 = vpop.f32.mrf.mxu0
  %v285 = vadd.f32 0.0, %v284
  %286 = vdwg.mxu0
  %v287 = vsel %vm157, %v276, 0.0
  %v288 = vsel %vm157, %v279, 0.0
  %v289 = vadd.f32 %v287, %v288
  %v290 = vrot.slane %v289, 4
  %v291 = vadd.f32 %v289, %v290
  %v292 = vrot.slane %v291, 2
  %v293 = vadd.f32 %v291, %v292
  %v294 = vrot.slane %v293, 1
  %v295 = vadd.f32 %v293, %v294
  %v296 = vmul.f32 %v295, %v173
  %v297 = vadd.f32 %v296, 1e-05
  %v298 = vrsqrt.pop %v297
  %v299 = vmul.f32 %v298, %v297
  %v300 = vmul.f32 %v299, %v298
  %v301 = vmul.f32 0.5, %v300
  %v302 = vsub.f32 1.5, %v301
  %v303 = vmul.f32 %v298, %v302
  %vm304 = vweird.f32 %v297
  %vm305 = vweird.f32 %v298
  %vm306 = vmor %vm304, %vm305
  %v307 = vsel %vm306, %v298, %v303
  %v308 = vsel %vm157, %v282, 0.0
  %v309 = vsel %vm157, %v285, 0.0
  %v310 = vadd.f32 %v308, %v309
  %v311 = vrot.slane %v310, 4
  %v312 = vadd.f32 %v310, %v311
  %v313 = vrot.slane %v312, 2
  %v314 = vadd.f32 %v312, %v313
  %v315 = vrot.slane %v314, 1
  %v316 = vadd.f32 %v314, %v315
  %v317 = vmul.f32 %v316, %v173
  %v318 = vadd.f32 %v317, 1e-05
  %v319 = vrsqrt.pop %v318
  %v320 = vmul.f32 %v319, %v318
  %v321 = vmul.f32 %v320, %v319
  %v322 = vmul.f32 0.5, %v321
  %v323 = vsub.f32 1.5, %v322
  %v324 = vmul.f32 %v319, %v323
  %vm325 = vweird.f32 %v318
  %vm326 = vweird.f32 %v319
  %vm327 = vmor %vm325, %vm326
  %v328 = vsel %vm327, %v319, %v324
  %330 = vset.pattern.permute.xlu0 0
  %331 = vperm.xlu0 %330, %v79
  %v332 = vpop.permute.xlu0 %331
  %335 = vset.pattern.permute.xlu0 0
  %336 = vperm.xlu0 %335, %v80
  %v337 = vpop.permute.xlu0 %336
  %340 = vset.pattern.permute.xlu0 0
  %341 = vperm.xlu0 %340, %v81
  %v342 = vpop.permute.xlu0 %341
  %345 = vset.pattern.permute.xlu0 0
  %346 = vperm.xlu0 %345, %v82
  %v347 = vpop.permute.xlu0 %346
  %v349 = vmul.f32 %v332, %v307
  %v350 = vmul.f32 %v337, %v307
  %v351 = vmul.f32 %v342, %v328
  %v352 = vmul.f32 %v347, %v328
  %v354 = vsel %vm157, %v349, 0
  %v357 = vsel %vm157, %v350, 0
  %v360 = vsel %vm157, %v351, 0
  %v363 = vsel %vm157, %v352, 0
  %365 = vmatpush.msra.mxu0 0.0
  %366 = vmatpush.msra.mxu0 0.0
  %367 = vmatpush.msra.mxu0 0.0
  %368 = vmatpush.msra.mxu0 0.0
  %369 = vmatpush.msra.mxu0 0.0
  %370 = vmatpush.msra.mxu0 0.0
  %371 = vmatpush.msra.mxu0 0.0
  %372 = vmatpush.msra.mxu0 0.0
  %373 = vmatpush.msra.mxu0 0.0
  %374 = vmatpush.msra.mxu0 0.0
  %375 = vmatpush.msra.mxu0 0.0
  %376 = vmatpush.msra.mxu0 0.0
  %377 = vmatpush.msra.mxu0 0.0
  %378 = vmatpush.msra.mxu0 0.0
  %379 = vmatpush.msra.mxu0 0.0
  %380 = vmatpush.msra.mxu0 %v103
  %381 = vmatmul.f32.gmra.mxu0 %v354
  %v382 = vpop.f32.mrf.mxu0
  %v383 = vadd.f32 0.0, %v382
  %384 = vmatmul.f32.gmra.mxu0 %v357
  %v385 = vpop.f32.mrf.mxu0
  %v386 = vadd.f32 0.0, %v385
  %387 = vmatmul.f32.gmra.mxu0 %v360
  %v388 = vpop.f32.mrf.mxu0
  %v389 = vadd.f32 0.0, %v388
  %390 = vmatmul.f32.gmra.mxu0 %v363
  %v391 = vpop.f32.mrf.mxu0
  %v392 = vadd.f32 0.0, %v391
  %393 = vdwg.mxu0
  %v394 = vmul.f32 %v250, %v383
  %v395 = vmul.f32 %v251, %v386
  %v396 = vmul.f32 %v252, %v389
  %v397 = vmul.f32 %v253, %v392
  %399 = vset.pattern.permute.xlu0 0
  %400 = vperm.xlu0 %399, %v83
  %v401 = vpop.permute.xlu0 %400
  %404 = vset.pattern.permute.xlu0 0
  %405 = vperm.xlu0 %404, %v84
  %v406 = vpop.permute.xlu0 %405
  %409 = vset.pattern.permute.xlu0 0
  %410 = vperm.xlu0 %409, %v85
  %v411 = vpop.permute.xlu0 %410
  %414 = vset.pattern.permute.xlu0 0
  %415 = vperm.xlu0 %414, %v86
  %v416 = vpop.permute.xlu0 %415
  %v418 = vadd.f32 %v394, %v401
  %v419 = vadd.f32 %v395, %v406
  %v420 = vadd.f32 %v396, %v411
  %v421 = vadd.f32 %v397, %v416
  %v422 = vxor.u32 %v418, 2147483648
  %v423 = vxor.u32 %v419, 2147483648
  %v424 = vxor.u32 %v420, 2147483648
  %v425 = vxor.u32 %v421, 2147483648
  %v426 = vmul.f32 %v422, 1.442695
  %v427 = vpow.pop %v426
  %v428 = vmul.f32 %v423, 1.442695
  %v429 = vpow.pop %v428
  %v430 = vmul.f32 %v424, 1.442695
  %v431 = vpow.pop %v430
  %v432 = vmul.f32 %v425, 1.442695
  %v433 = vpow.pop %v432
  %v434 = vadd.f32 %v427, 1.0
  %v435 = vadd.f32 %v429, 1.0
  %v436 = vadd.f32 %v431, 1.0
  %v437 = vadd.f32 %v433, 1.0
  %v438 = vrcp.pop %v434
  %v439 = vmul.f32 %v434, %v438
  %v440 = vsub.f32 1.0, %v439
  %v441 = vmul.f32 %v438, %v440
  %v442 = vadd.f32 %v438, %v441
  %vm443 = vweird.f32 %v434
  %vm444 = vweird.f32 %v438
  %vm445 = vmor %vm443, %vm444
  %v446 = vsel %vm445, %v438, %v442
  %v447 = vand.u32 2147483647, %v434
  %vm448 = vcmp.eq.f32.partialorder %v447, 8.507059e+37
  %v449 = vand.u32 %v434, 2147483648
  %v450 = vor.u32 1.1754944e-38, %v449
  %v451 = vsel %vm448, %v450, %v446
  %v452 = vmul.f32 1.0, %v451
  %v453 = vrcp.pop %v435
  %v454 = vmul.f32 %v435, %v453
  %v455 = vsub.f32 1.0, %v454
  %v456 = vmul.f32 %v453, %v455
  %v457 = vadd.f32 %v453, %v456
  %vm458 = vweird.f32 %v435
  %vm459 = vweird.f32 %v453
  %vm460 = vmor %vm458, %vm459
  %v461 = vsel %vm460, %v453, %v457
  %v462 = vand.u32 2147483647, %v435
  %vm463 = vcmp.eq.f32.partialorder %v462, 8.507059e+37
  %v464 = vand.u32 %v435, 2147483648
  %v465 = vor.u32 1.1754944e-38, %v464
  %v466 = vsel %vm463, %v465, %v461
  %v467 = vmul.f32 1.0, %v466
  %v468 = vrcp.pop %v436
  %v469 = vmul.f32 %v436, %v468
  %v470 = vsub.f32 1.0, %v469
  %v471 = vmul.f32 %v468, %v470
  %v472 = vadd.f32 %v468, %v471
  %vm473 = vweird.f32 %v436
  %vm474 = vweird.f32 %v468
  %vm475 = vmor %vm473, %vm474
  %v476 = vsel %vm475, %v468, %v472
  %v477 = vand.u32 2147483647, %v436
  %vm478 = vcmp.eq.f32.partialorder %v477, 8.507059e+37
  %v479 = vand.u32 %v436, 2147483648
  %v480 = vor.u32 1.1754944e-38, %v479
  %v481 = vsel %vm478, %v480, %v476
  %v482 = vmul.f32 1.0, %v481
  %v483 = vrcp.pop %v437
  %v484 = vmul.f32 %v437, %v483
  %v485 = vsub.f32 1.0, %v484
  %v486 = vmul.f32 %v483, %v485
  %v487 = vadd.f32 %v483, %v486
  %vm488 = vweird.f32 %v437
  %vm489 = vweird.f32 %v483
  %vm490 = vmor %vm488, %vm489
  %v491 = vsel %vm490, %v483, %v487
  %v492 = vand.u32 2147483647, %v437
  %vm493 = vcmp.eq.f32.partialorder %v492, 8.507059e+37
  %v494 = vand.u32 %v437, 2147483648
  %v495 = vor.u32 1.1754944e-38, %v494
  %v496 = vsel %vm493, %v495, %v491
  %v497 = vmul.f32 1.0, %v496
  %v498 = vmul.f32 %v418, %v452
  %v499 = vmul.f32 %v419, %v467
  %v500 = vmul.f32 %v420, %v482
  %v501 = vmul.f32 %v421, %v497
  %502 = vst [vmem:[%s7] sm:$0xff] %v498
  %503 = vst [vmem:[%s7 + $0x8] sm:$0xff] %v499
  %504 = vst [vmem:[%s7 + $0x10] sm:$0xff] %v500
  %505 = vst [vmem:[%s7 + $0x18] sm:$0xff] %v501
  // Predicated region
  $region30: #{decoder_forward.2} parent=0 // pred_check
    _
  $region31: #{decoder_forward.2} parent=0 // pred_check_branch
    %507 = sbr.rel (0) target = $region33
  $region32: #{decoder_forward.2} parent=0 // pred_region
    _
  $region33: #{decoder_forward.2} parent=0 // pred_fallthru
    _
  // Predicated region
  $region34: #{decoder_forward.2} parent=0 // pred_check
    _
  $region35: #{decoder_forward.2} parent=0 // pred_check_branch
    %509 = sbr.rel (0) target = $region37
  $region36: #{decoder_forward.2} parent=0 // pred_region
    _
  $region37: #{decoder_forward.2} parent=0 // pred_fallthru
    _

// kernel: decoder_forward.3
$region0: #{decoder_forward.3}
  #allocation0 [shape = 'u32[]', space=smem, size = 0x4, offset = 0x4, fixed_abs, tag = 'smem constant byte address 0x4 - core index']
  #allocation1 [shape = 'u32[72,128]{1,0:T(1,128)}', space=vmem, size = 0x9000, scoped, tag = 'internal scratch']
  %s0 = inlined_call_operand.vmem [shape: f32[128,512], index: 0, kind: input, shape index: {}]
  %s1 = inlined_call_operand.vmem [shape: f32[8,128], index: 1, kind: input, shape index: {}]
  %s2 = inlined_call_operand.vmem [shape: f32[8,1], index: 2, kind: input, shape index: {}]
  %s3 = inlined_call_operand.vmem [shape: f32[8,1], index: 3, kind: input, shape index: {}]
  %s4 = inlined_call_operand.vmem [shape: f32[8,1], index: 4, kind: input, shape index: {}]
  %s5 = inlined_call_operand.vmem [shape: f32[512,8], index: 5, kind: input, shape index: {}]
  %s6 = inlined_call_operand.vmem [shape: f32[8,512], index: 6, kind: input, shape index: {}]
  %s7 = inlined_call_operand.vmem [shape: f32[4,8], index: 7, kind: input, shape index: {}]
  %s8 = inlined_call_operand.vmem [shape: f32[4,1], index: 8, kind: input, shape index: {}]
  %s9 = inlined_call_operand.vmem [shape: f32[4,512], index: 9, kind: output, shape index: {}]
  %s10 = sld [smem:[#allocation0]]
  $region46: #{decoder_forward.3} parent=0
    _
  %s12 = ssub.s32 1, %s10
  %s13 = scalar_select 0, %s12, %s10
  // Predicated region
  $region2: #{decoder_forward.3} parent=0 // pred_check
    _
  $region3: #{decoder_forward.3} parent=0 // pred_check_branch
    %15 = sbr.rel (0) target = $region5
  $region4: #{decoder_forward.3} parent=0 // pred_region
    _
  $region5: #{decoder_forward.3} parent=0 // pred_fallthru
    _
  // Predicated region
  $region6: #{decoder_forward.3} parent=0 // pred_check
    _
  $region7: #{decoder_forward.3} parent=0 // pred_check_branch
    %17 = sbr.rel (0) target = $region9
  $region8: #{decoder_forward.3} parent=0 // pred_region
    _
  $region9: #{decoder_forward.3} parent=0 // pred_fallthru
    _
  // Predicated region
  $region10: #{decoder_forward.3} parent=0 // pred_check
    _
  $region11: #{decoder_forward.3} parent=0 // pred_check_branch
    %19 = sbr.rel (0) target = $region13
  $region12: #{decoder_forward.3} parent=0 // pred_region
    _
  $region13: #{decoder_forward.3} parent=0 // pred_fallthru
    _
  // Predicated region
  $region14: #{decoder_forward.3} parent=0 // pred_check
    _
  $region15: #{decoder_forward.3} parent=0 // pred_check_branch
    %21 = sbr.rel (0) target = $region17
  $region16: #{decoder_forward.3} parent=0 // pred_region
    _
  $region17: #{decoder_forward.3} parent=0 // pred_fallthru
    _
  // Predicated region
  $region18: #{decoder_forward.3} parent=0 // pred_check
    _
  $region19: #{decoder_forward.3} parent=0 // pred_check_branch
    %23 = sbr.rel (0) target = $region21
  $region20: #{decoder_forward.3} parent=0 // pred_region
    _
  $region21: #{decoder_forward.3} parent=0 // pred_fallthru
    _
  // Predicated region
  $region22: #{decoder_forward.3} parent=0 // pred_check
    _
  $region23: #{decoder_forward.3} parent=0 // pred_check_branch
    %25 = sbr.rel (0) target = $region25
  $region24: #{decoder_forward.3} parent=0 // pred_region
    _
  $region25: #{decoder_forward.3} parent=0 // pred_fallthru
    _
  // Predicated region
  $region26: #{decoder_forward.3} parent=0 // pred_check
    _
  $region27: #{decoder_forward.3} parent=0 // pred_check_branch
    %27 = sbr.rel (0) target = $region29
  $region28: #{decoder_forward.3} parent=0 // pred_region
    _
  $region29: #{decoder_forward.3} parent=0 // pred_fallthru
    _
  // Predicated region
  $region30: #{decoder_forward.3} parent=0 // pred_check
    _
  $region31: #{decoder_forward.3} parent=0 // pred_check_branch
    %29 = sbr.rel (0) target = $region33
  $region32: #{decoder_forward.3} parent=0 // pred_region
    _
  $region33: #{decoder_forward.3} parent=0 // pred_fallthru
    _
  // Predicated region
  $region34: #{decoder_forward.3} parent=0 // pred_check
    _
  $region35: #{decoder_forward.3} parent=0 // pred_check_branch
    %31 = sbr.rel (0) target = $region37
  $region36: #{decoder_forward.3} parent=0 // pred_region
    _
  $region37: #{decoder_forward.3} parent=0 // pred_fallthru
    _
  %v32 = vld [vmem:[%s1] sm:$0xff]
  %v33 = vld [vmem:[%s0] sm:$0xff]
  %v34 = vld [vmem:[%s0 + $0x8] sm:$0xff]
  %v35 = vld [vmem:[%s0 + $0x10] sm:$0xff]
  %v36 = vld [vmem:[%s0 + $0x18] sm:$0xff]
  %v37 = vld [vmem:[%s0 + $0x20] sm:$0xff]
  %v38 = vld [vmem:[%s0 + $0x28] sm:$0xff]
  %v39 = vld [vmem:[%s0 + $0x30] sm:$0xff]
  %v40 = vld [vmem:[%s0 + $0x38] sm:$0xff]
  %v41 = vld [vmem:[%s0 + $0x40] sm:$0xff]
  %v42 = vld [vmem:[%s0 + $0x48] sm:$0xff]
  %v43 = vld [vmem:[%s0 + $0x50] sm:$0xff]
  %v44 = vld [vmem:[%s0 + $0x58] sm:$0xff]
  %v45 = vld [vmem:[%s0 + $0x60] sm:$0xff]
  %v46 = vld [vmem:[%s0 + $0x68] sm:$0xff]
  %v47 = vld [vmem:[%s0 + $0x70] sm:$0xff]
  %v48 = vld [vmem:[%s0 + $0x78] sm:$0xff]
  %v49 = vld [vmem:[%s0 + $0x80] sm:$0xff]
  %v50 = vld [vmem:[%s0 + $0x88] sm:$0xff]
  %v51 = vld [vmem:[%s0 + $0x90] sm:$0xff]
  %v52 = vld [vmem:[%s0 + $0x98] sm:$0xff]
  %v53 = vld [vmem:[%s0 + $0xa0] sm:$0xff]
  %v54 = vld [vmem:[%s0 + $0xa8] sm:$0xff]
  %v55 = vld [vmem:[%s0 + $0xb0] sm:$0xff]
  %v56 = vld [vmem:[%s0 + $0xb8] sm:$0xff]
  %v57 = vld [vmem:[%s0 + $0xc0] sm:$0xff]
  %v58 = vld [vmem:[%s0 + $0xc8] sm:$0xff]
  %v59 = vld [vmem:[%s0 + $0xd0] sm:$0xff]
  %v60 = vld [vmem:[%s0 + $0xd8] sm:$0xff]
  %v61 = vld [vmem:[%s0 + $0xe0] sm:$0xff]
  %v62 = vld [vmem:[%s0 + $0xe8] sm:$0xff]
  %v63 = vld [vmem:[%s0 + $0xf0] sm:$0xff]
  %v64 = vld [vmem:[%s0 + $0xf8] sm:$0xff]
  %v65 = vld [vmem:[%s0 + $0x100] sm:$0xff]
  %v66 = vld [vmem:[%s0 + $0x108] sm:$0xff]
  %v67 = vld [vmem:[%s0 + $0x110] sm:$0xff]
  %v68 = vld [vmem:[%s0 + $0x118] sm:$0xff]
  %v69 = vld [vmem:[%s0 + $0x120] sm:$0xff]
  %v70 = vld [vmem:[%s0 + $0x128] sm:$0xff]
  %v71 = vld [vmem:[%s0 + $0x130] sm:$0xff]
  %v72 = vld [vmem:[%s0 + $0x138] sm:$0xff]
  %v73 = vld [vmem:[%s0 + $0x140] sm:$0xff]
  %v74 = vld [vmem:[%s0 + $0x148] sm:$0xff]
  %v75 = vld [vmem:[%s0 + $0x150] sm:$0xff]
  %v76 = vld [vmem:[%s0 + $0x158] sm:$0xff]
  %v77 = vld [vmem:[%s0 + $0x160] sm:$0xff]
  %v78 = vld [vmem:[%s0 + $0x168] sm:$0xff]
  %v79 = vld [vmem:[%s0 + $0x170] sm:$0xff]
  %v80 = vld [vmem:[%s0 + $0x178] sm:$0xff]
  %v81 = vld [vmem:[%s0 + $0x180] sm:$0xff]
  %v82 = vld [vmem:[%s0 + $0x188] sm:$0xff]
  %v83 = vld [vmem:[%s0 + $0x190] sm:$0xff]
  %v84 = vld [vmem:[%s0 + $0x198] sm:$0xff]
  %v85 = vld [vmem:[%s0 + $0x1a0] sm:$0xff]
  %v86 = vld [vmem:[%s0 + $0x1a8] sm:$0xff]
  %v87 = vld [vmem:[%s0 + $0x1b0] sm:$0xff]
  %v88 = vld [vmem:[%s0 + $0x1b8] sm:$0xff]
  %v89 = vld [vmem:[%s0 + $0x1c0] sm:$0xff]
  %v90 = vld [vmem:[%s0 + $0x1c8] sm:$0xff]
  %v91 = vld [vmem:[%s0 + $0x1d0] sm:$0xff]
  %v92 = vld [vmem:[%s0 + $0x1d8] sm:$0xff]
  %v93 = vld [vmem:[%s0 + $0x1e0] sm:$0xff]
  %v94 = vld [vmem:[%s0 + $0x1e8] sm:$0xff]
  %v95 = vld [vmem:[%s0 + $0x1f0] sm:$0xff]
  %v96 = vld [vmem:[%s0 + $0x1f8] sm:$0xff]
  %97 = vmatpush.msra.mxu0 %v93
  %98 = vmatpush.msra.mxu0 %v89
  %99 = vmatpush.msra.mxu0 %v85
  %100 = vmatpush.msra.mxu0 %v81
  %101 = vmatpush.msra.mxu0 %v77
  %102 = vmatpush.msra.mxu0 %v73
  %103 = vmatpush.msra.mxu0 %v69
  %104 = vmatpush.msra.mxu0 %v65
  %105 = vmatpush.msra.mxu0 %v61
  %106 = vmatpush.msra.mxu0 %v57
  %107 = vmatpush.msra.mxu0 %v53
  %108 = vmatpush.msra.mxu0 %v49
  %109 = vmatpush.msra.mxu0 %v45
  %110 = vmatpush.msra.mxu0 %v41
  %111 = vmatpush.msra.mxu0 %v37
  %112 = vmatpush.msra.mxu0 %v33
  %113 = vmatmul.f32.gmra.mxu0 %v32
  %v114 = vpop.f32.mrf.mxu0
  %v115 = vadd.f32 0.0, %v114
  %116 = vdwg.mxu0
  %117 = vmatpush.msra.mxu0 %v94
  %118 = vmatpush.msra.mxu0 %v90
  %119 = vmatpush.msra.mxu0 %v86
  %120 = vmatpush.msra.mxu0 %v82
  %121 = vmatpush.msra.mxu0 %v78
  %122 = vmatpush.msra.mxu0 %v74
  %123 = vmatpush.msra.mxu0 %v70
  %124 = vmatpush.msra.mxu0 %v66
  %125 = vmatpush.msra.mxu0 %v62
  %126 = vmatpush.msra.mxu0 %v58
  %127 = vmatpush.msra.mxu0 %v54
  %128 = vmatpush.msra.mxu0 %v50
  %129 = vmatpush.msra.mxu0 %v46
  %130 = vmatpush.msra.mxu0 %v42
  %131 = vmatpush.msra.mxu0 %v38
  %132 = vmatpush.msra.mxu0 %v34
  %133 = vmatmul.f32.gmra.mxu0 %v32
  %v134 = vpop.f32.mrf.mxu0
  %v135 = vadd.f32 0.0, %v134
  %136 = vdwg.mxu0
  %137 = vmatpush.msra.mxu0 %v95
  %138 = vmatpush.msra.mxu0 %v91
  %139 = vmatpush.msra.mxu0 %v87
  %140 = vmatpush.msra.mxu0 %v83
  %141 = vmatpush.msra.mxu0 %v79
  %142 = vmatpush.msra.mxu0 %v75
  %143 = vmatpush.msra.mxu0 %v71
  %144 = vmatpush.msra.mxu0 %v67
  %145 = vmatpush.msra.mxu0 %v63
  %146 = vmatpush.msra.mxu0 %v59
  %147 = vmatpush.msra.mxu0 %v55
  %148 = vmatpush.msra.mxu0 %v51
  %149 = vmatpush.msra.mxu0 %v47
  %150 = vmatpush.msra.mxu0 %v43
  %151 = vmatpush.msra.mxu0 %v39
  %152 = vmatpush.msra.mxu0 %v35
  %153 = vmatmul.f32.gmra.mxu0 %v32
  %v154 = vpop.f32.mrf.mxu0
  %v155 = vadd.f32 0.0, %v154
  %156 = vdwg.mxu0
  %157 = vmatpush.msra.mxu0 %v96
  %158 = vmatpush.msra.mxu0 %v92
  %159 = vmatpush.msra.mxu0 %v88
  %160 = vmatpush.msra.mxu0 %v84
  %161 = vmatpush.msra.mxu0 %v80
  %162 = vmatpush.msra.mxu0 %v76
  %163 = vmatpush.msra.mxu0 %v72
  %164 = vmatpush.msra.mxu0 %v68
  %165 = vmatpush.msra.mxu0 %v64
  %166 = vmatpush.msra.mxu0 %v60
  %167 = vmatpush.msra.mxu0 %v56
  %168 = vmatpush.msra.mxu0 %v52
  %169 = vmatpush.msra.mxu0 %v48
  %170 = vmatpush.msra.mxu0 %v44
  %171 = vmatpush.msra.mxu0 %v40
  %172 = vmatpush.msra.mxu0 %v36
  %173 = vmatmul.f32.gmra.mxu0 %v32
  %v174 = vpop.f32.mrf.mxu0
  %v175 = vadd.f32 0.0, %v174
  %176 = vdwg.mxu0
  %v177 = vld [vmem:[%s2] sm:$0xff]
  %v178 = vld [vmem:[%s3] sm:$0xff]
  %v179 = vld [vmem:[%s4] sm:$0xff]
  %v180 = vld [vmem:[%s5] sm:$0xff]
  %v181 = vld [vmem:[%s5 + $0x8] sm:$0xff]
  %v182 = vld [vmem:[%s5 + $0x10] sm:$0xff]
  %v183 = vld [vmem:[%s5 + $0x18] sm:$0xff]
  %v184 = vld [vmem:[%s5 + $0x20] sm:$0xff]
  %v185 = vld [vmem:[%s5 + $0x28] sm:$0xff]
  %v186 = vld [vmem:[%s5 + $0x30] sm:$0xff]
  %v187 = vld [vmem:[%s5 + $0x38] sm:$0xff]
  %v188 = vld [vmem:[%s5 + $0x40] sm:$0xff]
  %v189 = vld [vmem:[%s5 + $0x48] sm:$0xff]
  %v190 = vld [vmem:[%s5 + $0x50] sm:$0xff]
  %v191 = vld [vmem:[%s5 + $0x58] sm:$0xff]
  %v192 = vld [vmem:[%s5 + $0x60] sm:$0xff]
  %v193 = vld [vmem:[%s5 + $0x68] sm:$0xff]
  %v194 = vld [vmem:[%s5 + $0x70] sm:$0xff]
  %v195 = vld [vmem:[%s5 + $0x78] sm:$0xff]
  %v196 = vld [vmem:[%s5 + $0x80] sm:$0xff]
  %v197 = vld [vmem:[%s5 + $0x88] sm:$0xff]
  %v198 = vld [vmem:[%s5 + $0x90] sm:$0xff]
  %v199 = vld [vmem:[%s5 + $0x98] sm:$0xff]
  %v200 = vld [vmem:[%s5 + $0xa0] sm:$0xff]
  %v201 = vld [vmem:[%s5 + $0xa8] sm:$0xff]
  %v202 = vld [vmem:[%s5 + $0xb0] sm:$0xff]
  %v203 = vld [vmem:[%s5 + $0xb8] sm:$0xff]
  %v204 = vld [vmem:[%s5 + $0xc0] sm:$0xff]
  %v205 = vld [vmem:[%s5 + $0xc8] sm:$0xff]
  %v206 = vld [vmem:[%s5 + $0xd0] sm:$0xff]
  %v207 = vld [vmem:[%s5 + $0xd8] sm:$0xff]
  %v208 = vld [vmem:[%s5 + $0xe0] sm:$0xff]
  %v209 = vld [vmem:[%s5 + $0xe8] sm:$0xff]
  %v210 = vld [vmem:[%s5 + $0xf0] sm:$0xff]
  %v211 = vld [vmem:[%s5 + $0xf8] sm:$0xff]
  %v212 = vld [vmem:[%s5 + $0x100] sm:$0xff]
  %v213 = vld [vmem:[%s5 + $0x108] sm:$0xff]
  %v214 = vld [vmem:[%s5 + $0x110] sm:$0xff]
  %v215 = vld [vmem:[%s5 + $0x118] sm:$0xff]
  %v216 = vld [vmem:[%s5 + $0x120] sm:$0xff]
  %v217 = vld [vmem:[%s5 + $0x128] sm:$0xff]
  %v218 = vld [vmem:[%s5 + $0x130] sm:$0xff]
  %v219 = vld [vmem:[%s5 + $0x138] sm:$0xff]
  %v220 = vld [vmem:[%s5 + $0x140] sm:$0xff]
  %v221 = vld [vmem:[%s5 + $0x148] sm:$0xff]
  %v222 = vld [vmem:[%s5 + $0x150] sm:$0xff]
  %v223 = vld [vmem:[%s5 + $0x158] sm:$0xff]
  %v224 = vld [vmem:[%s5 + $0x160] sm:$0xff]
  %v225 = vld [vmem:[%s5 + $0x168] sm:$0xff]
  %v226 = vld [vmem:[%s5 + $0x170] sm:$0xff]
  %v227 = vld [vmem:[%s5 + $0x178] sm:$0xff]
  %v228 = vld [vmem:[%s5 + $0x180] sm:$0xff]
  %v229 = vld [vmem:[%s5 + $0x188] sm:$0xff]
  %v230 = vld [vmem:[%s5 + $0x190] sm:$0xff]
  %v231 = vld [vmem:[%s5 + $0x198] sm:$0xff]
  %v232 = vld [vmem:[%s5 + $0x1a0] sm:$0xff]
  %v233 = vld [vmem:[%s5 + $0x1a8] sm:$0xff]
  %v234 = vld [vmem:[%s5 + $0x1b0] sm:$0xff]
  %v235 = vld [vmem:[%s5 + $0x1b8] sm:$0xff]
  %v236 = vld [vmem:[%s5 + $0x1c0] sm:$0xff]
  %v237 = vld [vmem:[%s5 + $0x1c8] sm:$0xff]
  %v238 = vld [vmem:[%s5 + $0x1d0] sm:$0xff]
  %v239 = vld [vmem:[%s5 + $0x1d8] sm:$0xff]
  %v240 = vld [vmem:[%s5 + $0x1e0] sm:$0xff]
  %v241 = vld [vmem:[%s5 + $0x1e8] sm:$0xff]
  %v242 = vld [vmem:[%s5 + $0x1f0] sm:$0xff]
  %v243 = vld [vmem:[%s5 + $0x1f8] sm:$0xff]
  %v244 = vld [vmem:[%s6] sm:$0xff]
  %v245 = vld [vmem:[%s6 + $0x8] sm:$0xff]
  %v246 = vld [vmem:[%s6 + $0x10] sm:$0xff]
  %v247 = vld [vmem:[%s6 + $0x18] sm:$0xff]
  %v248 = vmul.f32 %v177, 256.0
  %250 = vset.pattern.permute.xlu0 0
  %251 = vperm.xlu0 %250, %v248
  %v252 = vpop.permute.xlu0 %251
  %254 = vmatpush.msra.mxu0 %v195
  %255 = vmatpush.msra.mxu0 %v194
  %256 = vmatpush.msra.mxu0 %v193
  %257 = vmatpush.msra.mxu0 %v192
  %258 = vmatpush.msra.mxu0 %v191
  %259 = vmatpush.msra.mxu0 %v190
  %260 = vmatpush.msra.mxu0 %v189
  %261 = vmatpush.msra.mxu0 %v188
  %262 = vmatpush.msra.mxu0 %v187
  %263 = vmatpush.msra.mxu0 %v186
  %264 = vmatpush.msra.mxu0 %v185
  %265 = vmatpush.msra.mxu0 %v184
  %266 = vmatpush.msra.mxu0 %v183
  %267 = vmatpush.msra.mxu0 %v182
  %268 = vmatpush.msra.mxu0 %v181
  %269 = vmatpush.msra.mxu0 %v180
  %270 = vmatmul.f32.gmra.mxu0 %v115
  %v271 = vpop.f32.mrf.mxu0
  %v272 = vadd.f32 %v252, %v271
  %273 = vdwg.mxu0
  %274 = vmatpush.msra.mxu0 %v211
  %275 = vmatpush.msra.mxu0 %v210
  %276 = vmatpush.msra.mxu0 %v209
  %277 = vmatpush.msra.mxu0 %v208
  %278 = vmatpush.msra.mxu0 %v207
  %279 = vmatpush.msra.mxu0 %v206
  %280 = vmatpush.msra.mxu0 %v205
  %281 = vmatpush.msra.mxu0 %v204
  %282 = vmatpush.msra.mxu0 %v203
  %283 = vmatpush.msra.mxu0 %v202
  %284 = vmatpush.msra.mxu0 %v201
  %285 = vmatpush.msra.mxu0 %v200
  %286 = vmatpush.msra.mxu0 %v199
  %287 = vmatpush.msra.mxu0 %v198
  %288 = vmatpush.msra.mxu0 %v197
  %289 = vmatpush.msra.mxu0 %v196
  %290 = vmatmul.f32.gmra.mxu0 %v135
  %v291 = vpop.f32.mrf.mxu0
  %v292 = vadd.f32 %v272, %v291
  %293 = vdwg.mxu0
  %294 = vmatpush.msra.mxu0 %v227
  %295 = vmatpush.msra.mxu0 %v226
  %296 = vmatpush.msra.mxu0 %v225
  %297 = vmatpush.msra.mxu0 %v224
  %298 = vmatpush.msra.mxu0 %v223
  %299 = vmatpush.msra.mxu0 %v222
  %300 = vmatpush.msra.mxu0 %v221
  %301 = vmatpush.msra.mxu0 %v220
  %302 = vmatpush.msra.mxu0 %v219
  %303 = vmatpush.msra.mxu0 %v218
  %304 = vmatpush.msra.mxu0 %v217
  %305 = vmatpush.msra.mxu0 %v216
  %306 = vmatpush.msra.mxu0 %v215
  %307 = vmatpush.msra.mxu0 %v214
  %308 = vmatpush.msra.mxu0 %v213
  %309 = vmatpush.msra.mxu0 %v212
  %310 = vmatmul.f32.gmra.mxu0 %v155
  %v311 = vpop.f32.mrf.mxu0
  %v312 = vadd.f32 %v292, %v311
  %313 = vdwg.mxu0
  %314 = vmatpush.msra.mxu0 %v243
  %315 = vmatpush.msra.mxu0 %v242
  %316 = vmatpush.msra.mxu0 %v241
  %317 = vmatpush.msra.mxu0 %v240
  %318 = vmatpush.msra.mxu0 %v239
  %319 = vmatpush.msra.mxu0 %v238
  %320 = vmatpush.msra.mxu0 %v237
  %321 = vmatpush.msra.mxu0 %v236
  %322 = vmatpush.msra.mxu0 %v235
  %323 = vmatpush.msra.mxu0 %v234
  %324 = vmatpush.msra.mxu0 %v233
  %325 = vmatpush.msra.mxu0 %v232
  %326 = vmatpush.msra.mxu0 %v231
  %327 = vmatpush.msra.mxu0 %v230
  %328 = vmatpush.msra.mxu0 %v229
  %329 = vmatpush.msra.mxu0 %v228
  %330 = vmatmul.f32.gmra.mxu0 %v175
  %v331 = vpop.f32.mrf.mxu0
  %v332 = vadd.f32 %v312, %v331
  %333 = vdwg.mxu0
  %vm334 = vcmask 60416
  %v335 = vsel %vm334, %v332, 0.0
  %v336 = vrot.slane %v335, 4
  %v337 = vadd.f32 %v335, %v336
  %v338 = vrot.slane %v337, 2
  %v339 = vadd.f32 %v337, %v338
  %v340 = vrot.slane %v339, 1
  %v341 = vadd.f32 %v339, %v340
  %v342 = vrcp.pop 1024.0
  %v343 = vmul.f32 1024.0, %v342
  %v344 = vsub.f32 1.0, %v343
  %v345 = vmul.f32 %v342, %v344
  %v346 = vadd.f32 %v342, %v345
  %vm347 = vweird.f32 %v342
  %v348 = vsel %vm347, %v342, %v346
  %v349 = vmul.f32 %v341, %v348
  %v351 = vrot.slane %v332, 4
  %v353 = vsel %vm334, %v351, 0.0
  %v354 = vrot.slane %v353, 4
  %v355 = vadd.f32 %v353, %v354
  %v356 = vrot.slane %v355, 2
  %v357 = vadd.f32 %v355, %v356
  %v358 = vrot.slane %v357, 1
  %v359 = vadd.f32 %v357, %v358
  %v360 = vmul.f32 %v359, %v348
  %vm361 = vcmask 1043456
  %v362 = vsel %vm361, %v349, %v360
  %364 = vset.pattern.permute.xlu0 0
  %365 = vperm.xlu0 %364, %v177
  %v366 = vpop.permute.xlu0 %365
  %v368 = vsub.f32 %v366, %v362
  %vm369 = vcmask 64512
  %v371 = vsel %vm369, %v368, 0
  %373 = vmatpush.msra.mxu0 0.0
  %374 = vmatpush.msra.mxu0 0.0
  %375 = vmatpush.msra.mxu0 0.0
  %376 = vmatpush.msra.mxu0 0.0
  %377 = vmatpush.msra.mxu0 0.0
  %378 = vmatpush.msra.mxu0 0.0
  %379 = vmatpush.msra.mxu0 0.0
  %380 = vmatpush.msra.mxu0 0.0
  %381 = vmatpush.msra.mxu0 0.0
  %382 = vmatpush.msra.mxu0 0.0
  %383 = vmatpush.msra.mxu0 0.0
  %384 = vmatpush.msra.mxu0 0.0
  %385 = vmatpush.msra.mxu0 0.0
  %386 = vmatpush.msra.mxu0 0.0
  %387 = vmatpush.msra.mxu0 0.0
  %388 = vmatpush.msra.mxu0 %v244
  %389 = vmatmul.f32.gmra.mxu0 %v371
  %v390 = vpop.f32.mrf.mxu0
  %v391 = vadd.f32 0.0, %v390
  %392 = vdwg.mxu0
  %393 = vmatpush.msra.mxu0 0.0
  %394 = vmatpush.msra.mxu0 0.0
  %395 = vmatpush.msra.mxu0 0.0
  %396 = vmatpush.msra.mxu0 0.0
  %397 = vmatpush.msra.mxu0 0.0
  %398 = vmatpush.msra.mxu0 0.0
  %399 = vmatpush.msra.mxu0 0.0
  %400 = vmatpush.msra.mxu0 0.0
  %401 = vmatpush.msra.mxu0 0.0
  %402 = vmatpush.msra.mxu0 0.0
  %403 = vmatpush.msra.mxu0 0.0
  %404 = vmatpush.msra.mxu0 0.0
  %405 = vmatpush.msra.mxu0 0.0
  %406 = vmatpush.msra.mxu0 0.0
  %407 = vmatpush.msra.mxu0 0.0
  %408 = vmatpush.msra.mxu0 %v245
  %409 = vmatmul.f32.gmra.mxu0 %v371
  %v410 = vpop.f32.mrf.mxu0
  %v411 = vadd.f32 0.0, %v410
  %412 = vdwg.mxu0
  %413 = vmatpush.msra.mxu0 0.0
  %414 = vmatpush.msra.mxu0 0.0
  %415 = vmatpush.msra.mxu0 0.0
  %416 = vmatpush.msra.mxu0 0.0
  %417 = vmatpush.msra.mxu0 0.0
  %418 = vmatpush.msra.mxu0 0.0
  %419 = vmatpush.msra.mxu0 0.0
  %420 = vmatpush.msra.mxu0 0.0
  %421 = vmatpush.msra.mxu0 0.0
  %422 = vmatpush.msra.mxu0 0.0
  %423 = vmatpush.msra.mxu0 0.0
  %424 = vmatpush.msra.mxu0 0.0
  %425 = vmatpush.msra.mxu0 0.0
  %426 = vmatpush.msra.mxu0 0.0
  %427 = vmatpush.msra.mxu0 0.0
  %428 = vmatpush.msra.mxu0 %v246
  %429 = vmatmul.f32.gmra.mxu0 %v371
  %v430 = vpop.f32.mrf.mxu0
  %v431 = vadd.f32 0.0, %v430
  %432 = vdwg.mxu0
  %433 = vmatpush.msra.mxu0 0.0
  %434 = vmatpush.msra.mxu0 0.0
  %435 = vmatpush.msra.mxu0 0.0
  %436 = vmatpush.msra.mxu0 0.0
  %437 = vmatpush.msra.mxu0 0.0
  %438 = vmatpush.msra.mxu0 0.0
  %439 = vmatpush.msra.mxu0 0.0
  %440 = vmatpush.msra.mxu0 0.0
  %441 = vmatpush.msra.mxu0 0.0
  %442 = vmatpush.msra.mxu0 0.0
  %443 = vmatpush.msra.mxu0 0.0
  %444 = vmatpush.msra.mxu0 0.0
  %445 = vmatpush.msra.mxu0 0.0
  %446 = vmatpush.msra.mxu0 0.0
  %447 = vmatpush.msra.mxu0 0.0
  %448 = vmatpush.msra.mxu0 %v247
  %449 = vmatmul.f32.gmra.mxu0 %v371
  %v450 = vpop.f32.mrf.mxu0
  %v451 = vadd.f32 0.0, %v450
  %452 = vdwg.mxu0
  %v453 = vadd.f32 %v115, %v391
  %v454 = vadd.f32 %v135, %v411
  %v455 = vadd.f32 %v155, %v431
  %v456 = vadd.f32 %v175, %v451
  %v457 = vmul.f32 %v453, %v453
  %v458 = vmul.f32 %v454, %v454
  %v459 = vmul.f32 %v455, %v455
  %v460 = vmul.f32 %v456, %v456
  %461 = vmatpush.msra.mxu0 %v195
  %462 = vmatpush.msra.mxu0 %v194
  %463 = vmatpush.msra.mxu0 %v193
  %464 = vmatpush.msra.mxu0 %v192
  %465 = vmatpush.msra.mxu0 %v191
  %466 = vmatpush.msra.mxu0 %v190
  %467 = vmatpush.msra.mxu0 %v189
  %468 = vmatpush.msra.mxu0 %v188
  %469 = vmatpush.msra.mxu0 %v187
  %470 = vmatpush.msra.mxu0 %v186
  %471 = vmatpush.msra.mxu0 %v185
  %472 = vmatpush.msra.mxu0 %v184
  %473 = vmatpush.msra.mxu0 %v183
  %474 = vmatpush.msra.mxu0 %v182
  %475 = vmatpush.msra.mxu0 %v181
  %476 = vmatpush.msra.mxu0 %v180
  %477 = vmatmul.f32.gmra.mxu0 %v457
  %v478 = vpop.f32.mrf.mxu0
  %v479 = vadd.f32 0.0, %v478
  %480 = vdwg.mxu0
  %481 = vmatpush.msra.mxu0 %v211
  %482 = vmatpush.msra.mxu0 %v210
  %483 = vmatpush.msra.mxu0 %v209
  %484 = vmatpush.msra.mxu0 %v208
  %485 = vmatpush.msra.mxu0 %v207
  %486 = vmatpush.msra.mxu0 %v206
  %487 = vmatpush.msra.mxu0 %v205
  %488 = vmatpush.msra.mxu0 %v204
  %489 = vmatpush.msra.mxu0 %v203
  %490 = vmatpush.msra.mxu0 %v202
  %491 = vmatpush.msra.mxu0 %v201
  %492 = vmatpush.msra.mxu0 %v200
  %493 = vmatpush.msra.mxu0 %v199
  %494 = vmatpush.msra.mxu0 %v198
  %495 = vmatpush.msra.mxu0 %v197
  %496 = vmatpush.msra.mxu0 %v196
  %497 = vmatmul.f32.gmra.mxu0 %v458
  %v498 = vpop.f32.mrf.mxu0
  %v499 = vadd.f32 %v479, %v498
  %500 = vdwg.mxu0
  %501 = vmatpush.msra.mxu0 %v227
  %502 = vmatpush.msra.mxu0 %v226
  %503 = vmatpush.msra.mxu0 %v225
  %504 = vmatpush.msra.mxu0 %v224
  %505 = vmatpush.msra.mxu0 %v223
  %506 = vmatpush.msra.mxu0 %v222
  %507 = vmatpush.msra.mxu0 %v221
  %508 = vmatpush.msra.mxu0 %v220
  %509 = vmatpush.msra.mxu0 %v219
  %510 = vmatpush.msra.mxu0 %v218
  %511 = vmatpush.msra.mxu0 %v217
  %512 = vmatpush.msra.mxu0 %v216
  %513 = vmatpush.msra.mxu0 %v215
  %514 = vmatpush.msra.mxu0 %v214
  %515 = vmatpush.msra.mxu0 %v213
  %516 = vmatpush.msra.mxu0 %v212
  %517 = vmatmul.f32.gmra.mxu0 %v459
  %v518 = vpop.f32.mrf.mxu0
  %v519 = vadd.f32 %v499, %v518
  %520 = vdwg.mxu0
  %521 = vmatpush.msra.mxu0 %v243
  %522 = vmatpush.msra.mxu0 %v242
  %523 = vmatpush.msra.mxu0 %v241
  %524 = vmatpush.msra.mxu0 %v240
  %525 = vmatpush.msra.mxu0 %v239
  %526 = vmatpush.msra.mxu0 %v238
  %527 = vmatpush.msra.mxu0 %v237
  %528 = vmatpush.msra.mxu0 %v236
  %529 = vmatpush.msra.mxu0 %v235
  %530 = vmatpush.msra.mxu0 %v234
  %531 = vmatpush.msra.mxu0 %v233
  %532 = vmatpush.msra.mxu0 %v232
  %533 = vmatpush.msra.mxu0 %v231
  %534 = vmatpush.msra.mxu0 %v230
  %535 = vmatpush.msra.mxu0 %v229
  %536 = vmatpush.msra.mxu0 %v228
  %537 = vmatmul.f32.gmra.mxu0 %v460
  %v538 = vpop.f32.mrf.mxu0
  %v539 = vadd.f32 %v519, %v538
  %540 = vdwg.mxu0
  %v541 = vsel %vm334, %v539, 0.0
  %v542 = vrot.slane %v541, 4
  %v543 = vadd.f32 %v541, %v542
  %v544 = vrot.slane %v543, 2
  %v545 = vadd.f32 %v543, %v544
  %v546 = vrot.slane %v545, 1
  %v547 = vadd.f32 %v545, %v546
  %v548 = vmul.f32 %v547, %v348
  %v549 = vadd.f32 %v548, 1e-05
  %v550 = vrsqrt.pop %v549
  %v551 = vmul.f32 %v550, %v549
  %v552 = vmul.f32 %v551, %v550
  %v553 = vmul.f32 0.5, %v552
  %v554 = vsub.f32 1.5, %v553
  %v555 = vmul.f32 %v550, %v554
  %vm556 = vweird.f32 %v549
  %vm557 = vweird.f32 %v550
  %vm558 = vmor %vm556, %vm557
  %v559 = vsel %vm558, %v550, %v555
  %v561 = vrot.slane %v539, 4
  %v563 = vsel %vm334, %v561, 0.0
  %v564 = vrot.slane %v563, 4
  %v565 = vadd.f32 %v563, %v564
  %v566 = vrot.slane %v565, 2
  %v567 = vadd.f32 %v565, %v566
  %v568 = vrot.slane %v567, 1
  %v569 = vadd.f32 %v567, %v568
  %v570 = vmul.f32 %v569, %v348
  %v571 = vadd.f32 %v570, 1e-05
  %v572 = vrsqrt.pop %v571
  %v573 = vmul.f32 %v572, %v571
  %v574 = vmul.f32 %v573, %v572
  %v575 = vmul.f32 0.5, %v574
  %v576 = vsub.f32 1.5, %v575
  %v577 = vmul.f32 %v572, %v576
  %vm578 = vweird.f32 %v571
  %vm579 = vweird.f32 %v572
  %vm580 = vmor %vm578, %vm579
  %v581 = vsel %vm580, %v572, %v577
  %v582 = vsel %vm361, %v559, %v581
  %584 = vset.pattern.permute.xlu0 0
  %585 = vperm.xlu0 %584, %v178
  %v586 = vpop.permute.xlu0 %585
  %v588 = vmul.f32 %v586, %v582
  %v590 = vsel %vm369, %v588, 0
  %592 = vmatpush.msra.mxu0 0.0
  %593 = vmatpush.msra.mxu0 0.0
  %594 = vmatpush.msra.mxu0 0.0
  %595 = vmatpush.msra.mxu0 0.0
  %596 = vmatpush.msra.mxu0 0.0
  %597 = vmatpush.msra.mxu0 0.0
  %598 = vmatpush.msra.mxu0 0.0
  %599 = vmatpush.msra.mxu0 0.0
  %600 = vmatpush.msra.mxu0 0.0
  %601 = vmatpush.msra.mxu0 0.0
  %602 = vmatpush.msra.mxu0 0.0
  %603 = vmatpush.msra.mxu0 0.0
  %604 = vmatpush.msra.mxu0 0.0
  %605 = vmatpush.msra.mxu0 0.0
  %606 = vmatpush.msra.mxu0 0.0
  %607 = vmatpush.msra.mxu0 %v244
  %608 = vmatmul.f32.gmra.mxu0 %v590
  %v609 = vpop.f32.mrf.mxu0
  %v610 = vadd.f32 0.0, %v609
  %611 = vdwg.mxu0
  %612 = vmatpush.msra.mxu0 0.0
  %613 = vmatpush.msra.mxu0 0.0
  %614 = vmatpush.msra.mxu0 0.0
  %615 = vmatpush.msra.mxu0 0.0
  %616 = vmatpush.msra.mxu0 0.0
  %617 = vmatpush.msra.mxu0 0.0
  %618 = vmatpush.msra.mxu0 0.0
  %619 = vmatpush.msra.mxu0 0.0
  %620 = vmatpush.msra.mxu0 0.0
  %621 = vmatpush.msra.mxu0 0.0
  %622 = vmatpush.msra.mxu0 0.0
  %623 = vmatpush.msra.mxu0 0.0
  %624 = vmatpush.msra.mxu0 0.0
  %625 = vmatpush.msra.mxu0 0.0
  %626 = vmatpush.msra.mxu0 0.0
  %627 = vmatpush.msra.mxu0 %v245
  %628 = vmatmul.f32.gmra.mxu0 %v590
  %v629 = vpop.f32.mrf.mxu0
  %v630 = vadd.f32 0.0, %v629
  %631 = vdwg.mxu0
  %632 = vmatpush.msra.mxu0 0.0
  %633 = vmatpush.msra.mxu0 0.0
  %634 = vmatpush.msra.mxu0 0.0
  %635 = vmatpush.msra.mxu0 0.0
  %636 = vmatpush.msra.mxu0 0.0
  %637 = vmatpush.msra.mxu0 0.0
  %638 = vmatpush.msra.mxu0 0.0
  %639 = vmatpush.msra.mxu0 0.0
  %640 = vmatpush.msra.mxu0 0.0
  %641 = vmatpush.msra.mxu0 0.0
  %642 = vmatpush.msra.mxu0 0.0
  %643 = vmatpush.msra.mxu0 0.0
  %644 = vmatpush.msra.mxu0 0.0
  %645 = vmatpush.msra.mxu0 0.0
  %646 = vmatpush.msra.mxu0 0.0
  %647 = vmatpush.msra.mxu0 %v246
  %648 = vmatmul.f32.gmra.mxu0 %v590
  %v649 = vpop.f32.mrf.mxu0
  %v650 = vadd.f32 0.0, %v649
  %651 = vdwg.mxu0
  %652 = vmatpush.msra.mxu0 0.0
  %653 = vmatpush.msra.mxu0 0.0
  %654 = vmatpush.msra.mxu0 0.0
  %655 = vmatpush.msra.mxu0 0.0
  %656 = vmatpush.msra.mxu0 0.0
  %657 = vmatpush.msra.mxu0 0.0
  %658 = vmatpush.msra.mxu0 0.0
  %659 = vmatpush.msra.mxu0 0.0
  %660 = vmatpush.msra.mxu0 0.0
  %661 = vmatpush.msra.mxu0 0.0
  %662 = vmatpush.msra.mxu0 0.0
  %663 = vmatpush.msra.mxu0 0.0
  %664 = vmatpush.msra.mxu0 0.0
  %665 = vmatpush.msra.mxu0 0.0
  %666 = vmatpush.msra.mxu0 0.0
  %667 = vmatpush.msra.mxu0 %v247
  %668 = vmatmul.f32.gmra.mxu0 %v590
  %v669 = vpop.f32.mrf.mxu0
  %v670 = vadd.f32 0.0, %v669
  %671 = vdwg.mxu0
  %v672 = vmul.f32 %v453, %v610
  %v673 = vmul.f32 %v454, %v630
  %v674 = vmul.f32 %v455, %v650
  %v675 = vmul.f32 %v456, %v670
  %677 = vset.pattern.permute.xlu0 0
  %678 = vperm.xlu0 %677, %v179
  %v679 = vpop.permute.xlu0 %678
  %v681 = vadd.f32 %v672, %v679
  %v682 = vadd.f32 %v673, %v679
  %v683 = vadd.f32 %v674, %v679
  %v684 = vadd.f32 %v675, %v679
  %v685 = vxor.u32 %v681, 2147483648
  %v686 = vxor.u32 %v682, 2147483648
  %v687 = vxor.u32 %v683, 2147483648
  %v688 = vxor.u32 %v684, 2147483648
  %v689 = vmul.f32 %v685, 1.442695
  %v690 = vpow.pop %v689
  %v691 = vmul.f32 %v686, 1.442695
  %v692 = vpow.pop %v691
  %v693 = vmul.f32 %v687, 1.442695
  %v694 = vpow.pop %v693
  %v695 = vmul.f32 %v688, 1.442695
  %v696 = vpow.pop %v695
  %v697 = vadd.f32 %v690, 1.0
  %v698 = vadd.f32 %v692, 1.0
  %v699 = vadd.f32 %v694, 1.0
  %v700 = vadd.f32 %v696, 1.0
  %v701 = vrcp.pop %v697
  %v702 = vmul.f32 %v697, %v701
  %v703 = vsub.f32 1.0, %v702
  %v704 = vmul.f32 %v701, %v703
  %v705 = vadd.f32 %v701, %v704
  %vm706 = vweird.f32 %v697
  %vm707 = vweird.f32 %v701
  %vm708 = vmor %vm706, %vm707
  %v709 = vsel %vm708, %v701, %v705
  %v710 = vand.u32 2147483647, %v697
  %vm711 = vcmp.eq.f32.partialorder %v710, 8.507059e+37
  %v712 = vand.u32 %v697, 2147483648
  %v713 = vor.u32 1.1754944e-38, %v712
  %v714 = vsel %vm711, %v713, %v709
  %v715 = vmul.f32 1.0, %v714
  %v716 = vrcp.pop %v698
  %v717 = vmul.f32 %v698, %v716
  %v718 = vsub.f32 1.0, %v717
  %v719 = vmul.f32 %v716, %v718
  %v720 = vadd.f32 %v716, %v719
  %vm721 = vweird.f32 %v698
  %vm722 = vweird.f32 %v716
  %vm723 = vmor %vm721, %vm722
  %v724 = vsel %vm723, %v716, %v720
  %v725 = vand.u32 2147483647, %v698
  %vm726 = vcmp.eq.f32.partialorder %v725, 8.507059e+37
  %v727 = vand.u32 %v698, 2147483648
  %v728 = vor.u32 1.1754944e-38, %v727
  %v729 = vsel %vm726, %v728, %v724
  %v730 = vmul.f32 1.0, %v729
  %v731 = vrcp.pop %v699
  %v732 = vmul.f32 %v699, %v731
  %v733 = vsub.f32 1.0, %v732
  %v734 = vmul.f32 %v731, %v733
  %v735 = vadd.f32 %v731, %v734
  %vm736 = vweird.f32 %v699
  %vm737 = vweird.f32 %v731
  %vm738 = vmor %vm736, %vm737
  %v739 = vsel %vm738, %v731, %v735
  %v740 = vand.u32 2147483647, %v699
  %vm741 = vcmp.eq.f32.partialorder %v740, 8.507059e+37
  %v742 = vand.u32 %v699, 2147483648
  %v743 = vor.u32 1.1754944e-38, %v742
  %v744 = vsel %vm741, %v743, %v739
  %v745 = vmul.f32 1.0, %v744
  %v746 = vrcp.pop %v700
  %v747 = vmul.f32 %v700, %v746
  %v748 = vsub.f32 1.0, %v747
  %v749 = vmul.f32 %v746, %v748
  %v750 = vadd.f32 %v746, %v749
  %vm751 = vweird.f32 %v700
  %vm752 = vweird.f32 %v746
  %vm753 = vmor %vm751, %vm752
  %v754 = vsel %vm753, %v746, %v750
  %v755 = vand.u32 2147483647, %v700
  %vm756 = vcmp.eq.f32.partialorder %v755, 8.507059e+37
  %v757 = vand.u32 %v700, 2147483648
  %v758 = vor.u32 1.1754944e-38, %v757
  %v759 = vsel %vm756, %v758, %v754
  %v760 = vmul.f32 1.0, %v759
  %v761 = vmul.f32 %v681, %v715
  %v762 = vmul.f32 %v682, %v730
  %v763 = vmul.f32 %v683, %v745
  %v764 = vmul.f32 %v684, %v760
  %v765 = vld [vmem:[%s7] sm:$0xf]
  %v766 = vld [vmem:[%s8] sm:$0xf]
  %768 = vset.pattern.permute.xlu0 0
  %769 = vperm.xlu0 %768, %v766
  %v770 = vpop.permute.xlu0 %769
  %v773 = vsel %vm369, %v765, 0
  %775 = vmatpush.msra.mxu0 0.0
  %776 = vmatpush.msra.mxu0 0.0
  %777 = vmatpush.msra.mxu0 0.0
  %778 = vmatpush.msra.mxu0 0.0
  %779 = vmatpush.msra.mxu0 0.0
  %780 = vmatpush.msra.mxu0 0.0
  %781 = vmatpush.msra.mxu0 0.0
  %782 = vmatpush.msra.mxu0 0.0
  %783 = vmatpush.msra.mxu0 0.0
  %784 = vmatpush.msra.mxu0 0.0
  %785 = vmatpush.msra.mxu0 0.0
  %786 = vmatpush.msra.mxu0 0.0
  %787 = vmatpush.msra.mxu0 0.0
  %788 = vmatpush.msra.mxu0 0.0
  %789 = vmatpush.msra.mxu0 0.0
  %790 = vmatpush.msra.mxu0 %v761
  %791 = vmatmul.f32.gmra.mxu0 %v773
  %v792 = vpop.f32.mrf.mxu0
  %v793 = vadd.f32 %v770, %v792
  %794 = vdwg.mxu0
  %795 = vmatpush.msra.mxu0 0.0
  %796 = vmatpush.msra.mxu0 0.0
  %797 = vmatpush.msra.mxu0 0.0
  %798 = vmatpush.msra.mxu0 0.0
  %799 = vmatpush.msra.mxu0 0.0
  %800 = vmatpush.msra.mxu0 0.0
  %801 = vmatpush.msra.mxu0 0.0
  %802 = vmatpush.msra.mxu0 0.0
  %803 = vmatpush.msra.mxu0 0.0
  %804 = vmatpush.msra.mxu0 0.0
  %805 = vmatpush.msra.mxu0 0.0
  %806 = vmatpush.msra.mxu0 0.0
  %807 = vmatpush.msra.mxu0 0.0
  %808 = vmatpush.msra.mxu0 0.0
  %809 = vmatpush.msra.mxu0 0.0
  %810 = vmatpush.msra.mxu0 %v762
  %811 = vmatmul.f32.gmra.mxu0 %v773
  %v812 = vpop.f32.mrf.mxu0
  %v813 = vadd.f32 %v770, %v812
  %814 = vdwg.mxu0
  %815 = vmatpush.msra.mxu0 0.0
  %816 = vmatpush.msra.mxu0 0.0
  %817 = vmatpush.msra.mxu0 0.0
  %818 = vmatpush.msra.mxu0 0.0
  %819 = vmatpush.msra.mxu0 0.0
  %820 = vmatpush.msra.mxu0 0.0
  %821 = vmatpush.msra.mxu0 0.0
  %822 = vmatpush.msra.mxu0 0.0
  %823 = vmatpush.msra.mxu0 0.0
  %824 = vmatpush.msra.mxu0 0.0
  %825 = vmatpush.msra.mxu0 0.0
  %826 = vmatpush.msra.mxu0 0.0
  %827 = vmatpush.msra.mxu0 0.0
  %828 = vmatpush.msra.mxu0 0.0
  %829 = vmatpush.msra.mxu0 0.0
  %830 = vmatpush.msra.mxu0 %v763
  %831 = vmatmul.f32.gmra.mxu0 %v773
  %v832 = vpop.f32.mrf.mxu0
  %v833 = vadd.f32 %v770, %v832
  %834 = vdwg.mxu0
  %835 = vmatpush.msra.mxu0 0.0
  %836 = vmatpush.msra.mxu0 0.0
  %837 = vmatpush.msra.mxu0 0.0
  %838 = vmatpush.msra.mxu0 0.0
  %839 = vmatpush.msra.mxu0 0.0
  %840 = vmatpush.msra.mxu0 0.0
  %841 = vmatpush.msra.mxu0 0.0
  %842 = vmatpush.msra.mxu0 0.0
  %843 = vmatpush.msra.mxu0 0.0
  %844 = vmatpush.msra.mxu0 0.0
  %845 = vmatpush.msra.mxu0 0.0
  %846 = vmatpush.msra.mxu0 0.0
  %847 = vmatpush.msra.mxu0 0.0
  %848 = vmatpush.msra.mxu0 0.0
  %849 = vmatpush.msra.mxu0 0.0
  %850 = vmatpush.msra.mxu0 %v764
  %851 = vmatmul.f32.gmra.mxu0 %v773
  %v852 = vpop.f32.mrf.mxu0
  %v853 = vadd.f32 %v770, %v852
  %854 = vdwg.mxu0
  %v859 = vrot.slane %v813, 4
  %v860 = vrot.slane %v853, 4
  %v861 = vsel %vm361, %v793, %v859
  %v862 = vsel %vm361, %v833, %v860
  %865 = vst [vmem:[%s9] sm:$0xff] %v861
  %866 = vst [vmem:[%s9 + $0x8] sm:$0xff] %v862
  // Predicated region
  $region38: #{decoder_forward.3} parent=0 // pred_check
    _
  $region39: #{decoder_forward.3} parent=0 // pred_check_branch
    %868 = sbr.rel (0) target = $region41
  $region40: #{decoder_forward.3} parent=0 // pred_region
    _
  $region41: #{decoder_forward.3} parent=0 // pred_fallthru
    _
  // Predicated region
  $region42: #{decoder_forward.3} parent=0 // pred_check
    _
  $region43: #{decoder_forward.3} parent=0 // pred_check_branch
    %870 = sbr.rel (0) target = $region45
  $region44: #{decoder_forward.3} parent=0 // pred_region
    _
  $region45: #{decoder_forward.3} parent=0 // pred_fallthru
    _

</llo_original>
